<compile_context>
chip_gen: v7x
topology: tpu7x:2x2x1
jax: 0.10.0
libtpu: 0.0.40
codegen_flags: <defaults>
</compile_context>

<pallas_src>
import functools
import math

import jax
import jax.numpy as jnp
from jax.experimental import pallas as pl
from jax.experimental.pallas import tpu as pltpu


def _round_up(x, m):
    return (x + m - 1) // m * m


def _reorder_gates(w, hidden):
    """Reorder the 4H gate columns from torch's (i, f, g, o) to (i, f, o, g)."""
    return jnp.concatenate(
        [w[..., :2 * hidden], w[..., 3 * hidden:4 * hidden], w[..., 2 * hidden:3 * hidden]],
        axis=-1)


def _lstm_kernel(idx_ref, gxtab_ref, whh_ref, out_ref,
                 h_scr, c_scr, gx_scr, out_scr, *, ts, bp, hidden, n_users):
    """One grid step == one chunk of `ts` timesteps for the whole padded batch.

    idx_ref   : (ts*bp, 1) int32  user indices, (t, b) ordered
    gxtab_ref : (U, 4H)           emb @ W_ih^T + b  (resident, constant)
    whh_ref   : (H, 4H)           W_hh^T            (resident, constant)
    out_ref   : (ts*bp*H/128,128) lane-dense packed hidden states for the chunk
    h_scr/c_scr : (bp, H)         recurrent state, persists across grid steps
    gx_scr    : (ts*bp, 4H)       gathered input projection for the chunk
    out_scr   : (ts*bp, H)        per-chunk hidden states before lane packing
    """
    chunk = pl.program_id(0)
    H = hidden
    pack = 128 // H                      # batch rows packed per 128-lane output row
    packed_rows = (ts * bp) // pack

    @pl.when(chunk == 0)
    def _():
        h_scr[...] = jnp.zeros_like(h_scr)
        c_scr[...] = jnp.zeros_like(c_scr)

    # ---- Fused embedding gather + input projection (hoisted off the recurrence) ----
    # gxtab already holds emb @ W_ih^T + bias, so gather == input projection.
    # Exact select-accumulate (adds/multiplies only by exact 0/1) keeps f32 bit
    # behaviour; fine for small tables.  TODO(synk): DMA gather for large tables.
    idx = idx_ref[...]                                   # (ts*bp, 1) int32
    tab = gxtab_ref[...]                                 # (U, 4H)
    gx = jnp.zeros((ts * bp, 4 * H), jnp.float32)
    for u in range(n_users):                             # static unroll (small table)
        gx = gx + jnp.where(idx == u, tab[u:u + 1, :], 0.0)
    gx_scr[...] = gx

    whh = whh_ref[...]          # read the recurrent weights once per chunk

    def step(t, carry):
        h_prev, c_prev = carry
        row0 = pl.multiple_of(t * bp, bp)                # aligned sublane offset
        gx_t = gx_scr[pl.ds(row0, bp), :]                # (bp, 4H)

        # Only the recurrent matmul remains inside the timestep loop.
        gates = gx_t + jnp.dot(h_prev, whh, preferred_element_type=jnp.float32)

        # Gate order (i, f, o, g): one sigmoid over [0:3H], one tanh over [3H:4H].
        sg = jax.nn.sigmoid(gates[:, :3 * H])
        gg = jnp.tanh(gates[:, 3 * H:])
        i_g = sg[:, 0:H]
        f_g = sg[:, H:2 * H]
        o_g = sg[:, 2 * H:3 * H]

        c_new = f_g * c_prev + i_g * gg
        h_new = o_g * jnp.tanh(c_new)

        out_scr[pl.ds(row0, bp), :] = h_new
        return h_new, c_new

    h_last, c_last = jax.lax.fori_loop(
        0, ts, step, (h_scr[...], c_scr[...]),
        unroll=True if ts <= 32 else 8)

    h_scr[...] = h_last
    c_scr[...] = c_last

    # ---- Lane-dense packed writeback: (ts*bp, H) -> (ts*bp*H/128, 128) ----
    # packed row r = [src row pack*r | pack*r+1 | ... ]  (same row-major bytes).
    parts = [out_scr[pl.ds(j, packed_rows, stride=pack), :] for j in range(pack)]
    packed = parts[0] if pack == 1 else jnp.concatenate(parts, axis=1)
    out_ref[...] = packed.astype(out_ref.dtype)


def lstm_pallas(examples, embedding, w_ih, w_hh, b_ih, b_hh):
    """examples: (B, S) int32 user indices; embedding: (U, E).  Returns (B, S, H)."""
    B, S = examples.shape
    U, E = embedding.shape
    H = w_hh.shape[1]                 # w_hh: (4H, H)
    assert w_ih.shape == (4 * H, E)
    # TODO(synk): pad H to a divisor of 128 (or a multiple of 128) for other sizes.
    assert H <= 128 and 128 % H == 0, "lane-dense packing assumes H divides 128"

    # Batch padding: sublane multiple AND Bp*H a multiple of 128 (lane-dense rows).
    Bp = _round_up(max(B, 8), 8)
    while (Bp * H) % 128:
        Bp += 8
    rows_per_step = Bp * H // 128

    # Time-chunk size: amortize per-grid-step overhead, keep packed output blocks
    # sublane-aligned, and stay inside a conservative VMEM budget (v7x-safe).
    ts_align = 8 // math.gcd(rows_per_step, 8)
    ts = _round_up(min(max(S, 1), 128), ts_align)

    def footprint(ts_):
        idx_b = 2 * ts_ * Bp * 4                       # idx double buffer
        out_b = 2 * ts_ * Bp * H * 4                   # packed out double buffer
        tab_b = 2 * U * 4 * H * 4                      # gx_table (resident)
        whh_b = 2 * H * 4 * H * 4                      # W_hh^T (resident)
        scr_b = (2 * Bp * H + ts_ * Bp * 4 * H + ts_ * Bp * H) * 4
        return idx_b + out_b + tab_b + whh_b + scr_b

    budget = 40 * 1024 * 1024
    while ts > ts_align and footprint(ts) > budget:
        ts = _round_up(max(ts // 2, ts_align), ts_align)

    Sp = _round_up(S, ts)
    n_chunks = Sp // ts

    # Indices: time-major, padded, as a tiny int32 column (the only per-chunk input DMA).
    idx = jnp.transpose(examples.astype(jnp.int32))            # (S, B)
    idx = jnp.pad(idx, ((0, Sp - S), (0, Bp - B)))              # pad with user 0
    idx = idx.reshape(Sp * Bp, 1)

    # Fold the input projection into the user table (exact row-wise algebra) and
    # reorder gate columns to (i, f, o, g).
    wih_t = _reorder_gates(jnp.transpose(w_ih), H)              # (E, 4H)
    whh_t = _reorder_gates(jnp.transpose(w_hh), H)              # (H, 4H)
    bias = _reorder_gates((b_ih + b_hh).reshape(1, 4 * H), H)   # (1, 4H)
    gx_table = embedding @ wih_t + bias                         # (U, 4H)

    kernel = functools.partial(_lstm_kernel, ts=ts, bp=Bp, hidden=H, n_users=U)
    vmem_limit = int(min(max(2 * footprint(ts), 32 * 1024 * 1024), 48 * 1024 * 1024))
    packed_rows_per_chunk = ts * Bp * H // 128

    out_packed = pl.pallas_call(
        kernel,
        out_shape=jax.ShapeDtypeStruct((Sp * Bp * H // 128, 128), embedding.dtype),
        grid_spec=pltpu.PrefetchScalarGridSpec(
            num_scalar_prefetch=0,
            grid=(n_chunks,),
            in_specs=[
                pl.BlockSpec((ts * Bp, 1), lambda c: (c, 0)),        # user indices
                pl.BlockSpec((U, 4 * H), lambda c: (0, 0)),          # gx_table (const)
                pl.BlockSpec((H, 4 * H), lambda c: (0, 0)),          # W_hh^T   (const)
            ],
            out_specs=pl.BlockSpec((packed_rows_per_chunk, 128), lambda c: (c, 0)),
            scratch_shapes=[
                pltpu.VMEM((Bp, H), jnp.float32),              # h state
                pltpu.VMEM((Bp, H), jnp.float32),              # c state
                pltpu.VMEM((ts * Bp, 4 * H), jnp.float32),     # gathered projection
                pltpu.VMEM((ts * Bp, H), jnp.float32),         # per-chunk hidden states
            ],
        ),
        compiler_params=pltpu.CompilerParams(
            dimension_semantics=("arbitrary",),   # time recurrence is sequential
            vmem_limit_bytes=vmem_limit,
            # TODO(synk): add a leading "parallel" batch-block axis on v7x (2 TCs).
        ),
    )(idx, gx_table, whh_t)

    # (Sp*Bp*H/128, 128) has identical row-major bytes as (Sp, Bp, H): free reshape.
    out_sbh = out_packed.reshape(Sp, Bp, H)[:S, :B, :]
    return jnp.transpose(out_sbh, (1, 0, 2))                     # (B, S, H) batch_first


def cascade_lstm_forward(examples, user_cas_embedding, params):
    """Mirror of CascadeLSTM.forward: embedding lookup, then LSTM over sequence."""
    return lstm_pallas(examples, user_cas_embedding,
                       params["w_ih"], params["w_hh"], params["b_ih"], params["b_hh"])


def _reference_lstm(x_bse, w_ih, w_hh, b_ih, b_hh):
    """Pure-JAX reference matching torch.nn.LSTM (batch_first, 1 layer)."""
    B, S, E = x_bse.shape
    H = w_hh.shape[1]

    def step(carry, x_t):
        h, c = carry
        gates = x_t @ w_ih.T + h @ w_hh.T + b_ih + b_hh
        i = jax.nn.sigmoid(gates[:, 0 * H:1 * H])
        f = jax.nn.sigmoid(gates[:, 1 * H:2 * H])
        g = jnp.tanh(gates[:, 2 * H:3 * H])
        o = jax.nn.sigmoid(gates[:, 3 * H:4 * H])
        c = f * c + i * g
        h = o * jnp.tanh(c)
        return (h, c), h

    h0 = jnp.zeros((B, H), jnp.float32)
    c0 = jnp.zeros((B, H), jnp.float32)
    _, hs = jax.lax.scan(step, (h0, c0), jnp.transpose(x_bse, (1, 0, 2)))
    return jnp.transpose(hs, (1, 0, 2))


if __name__ == "__main__":
    emb_dim = 32          # E == H for this module
    batch = 2
    seq_len = 8
    num_users = 16

    key = jax.random.PRNGKey(0)
    k_emb, k_ex, k1, k2, k3, k4 = jax.random.split(key, 6)

    # Deterministic synthetic parameters (torch default init: U(-1/sqrt(H), 1/sqrt(H)))
    bound = 1.0 / jnp.sqrt(jnp.float32(emb_dim))
    params = {
        "w_ih": jax.random.uniform(k1, (4 * emb_dim, emb_dim), jnp.float32, -bound, bound),
        "w_hh": jax.random.uniform(k2, (4 * emb_dim, emb_dim), jnp.float32, -bound, bound),
        "b_ih": jax.random.uniform(k3, (4 * emb_dim,), jnp.float32, -bound, bound),
        "b_hh": jax.random.uniform(k4, (4 * emb_dim,), jnp.float32, -bound, bound),
    }

    user_cas_embedding = jax.random.normal(k_emb, (num_users, emb_dim), jnp.float32)
    examples = jax.random.randint(k_ex, (batch, seq_len), 0, num_users, dtype=jnp.int32)

    out = cascade_lstm_forward(examples, user_cas_embedding, params)
    out = jax.block_until_ready(out)

    # Correctness check against a pure-JAX reference of the same math.
    cas_embedding = jnp.take(user_cas_embedding, examples, axis=0)   # (B, S, E)
    ref = _reference_lstm(cas_embedding, params["w_ih"], params["w_hh"],
                          params["b_ih"], params["b_hh"])
    assert out.shape == (batch, seq_len, emb_dim)
    assert jnp.allclose(out, ref, atol=1e-5, rtol=1e-5)

    print("KERNEL_OK")
</pallas_src>

<mosaic_0001>
module attributes {stable_mosaic.version = 11 : i64} {
  func.func @_lstm_kernel(%arg0: i32, %arg1: memref<64x1xi32, #tpu.memory_space<vmem>>, %arg2: memref<16x128xf32, #tpu.memory_space<vmem>>, %arg3: memref<32x128xf32, #tpu.memory_space<vmem>>, %arg4: memref<16x128xf32, #tpu.memory_space<vmem>>, %arg5: memref<8x32xf32, #tpu.memory_space<vmem>>, %arg6: memref<8x32xf32, #tpu.memory_space<vmem>>, %arg7: memref<64x128xf32, #tpu.memory_space<vmem>>, %arg8: memref<64x32xf32, #tpu.memory_space<vmem>>) attributes {dimension_semantics = [#tpu.dimension_semantics<arbitrary>], iteration_bounds = array<i64: 1>, scalar_prefetch = 0 : i64, scratch_operands = 4 : i64, tpu.core_type = #tpu.core_type<tc>, window_params = [{transform_indices = @transform_0, window_bounds = array<i64: 64, 1>}, {pipeline_mode = #tpu.pipeline_mode<synchronous>, transform_indices = @transform_1, window_bounds = array<i64: 16, 128>}, {pipeline_mode = #tpu.pipeline_mode<synchronous>, transform_indices = @transform_2, window_bounds = array<i64: 32, 128>}, {transform_indices = @transform_3, window_bounds = array<i64: 16, 128>}]} {
    %c0_i32 = arith.constant 0 : i32
    %0 = arith.cmpi eq, %arg0, %c0_i32 : i32
    %1 = arith.extui %0 : i1 to i32
    %c0_i32_0 = arith.constant 0 : i32
    %2 = arith.cmpi ne, %1, %c0_i32_0 : i32
    scf.if %2 {
      %cst_89 = arith.constant 0.000000e+00 : f32
      %370 = vector.broadcast %cst_89 : f32 to vector<8x32xf32>
      %c0_90 = arith.constant 0 : index
      %c0_91 = arith.constant 0 : index
      %371 = vector.load %arg5[%c0_90, %c0_91] : memref<8x32xf32, #tpu.memory_space<vmem>>, vector<8x32xf32>
      tpu.vector_store %arg5[%c0_90, %c0_91], %370 {strides = array<i32>} : memref<8x32xf32, #tpu.memory_space<vmem>>, vector<8x32xf32>,
      %cst_92 = arith.constant 0.000000e+00 : f32
      %372 = vector.broadcast %cst_92 : f32 to vector<8x32xf32>
      %c0_93 = arith.constant 0 : index
      %c0_94 = arith.constant 0 : index
      %373 = vector.load %arg6[%c0_93, %c0_94] : memref<8x32xf32, #tpu.memory_space<vmem>>, vector<8x32xf32>
      tpu.vector_store %arg6[%c0_93, %c0_94], %372 {strides = array<i32>} : memref<8x32xf32, #tpu.memory_space<vmem>>, vector<8x32xf32>,
    } else {
    }
    %c0 = arith.constant 0 : index
    %c0_1 = arith.constant 0 : index
    %3 = vector.load %arg1[%c0, %c0_1] : memref<64x1xi32, #tpu.memory_space<vmem>>, vector<64x1xi32>
    %c0_2 = arith.constant 0 : index
    %c0_3 = arith.constant 0 : index
    %4 = vector.load %arg2[%c0_2, %c0_3] : memref<16x128xf32, #tpu.memory_space<vmem>>, vector<16x128xf32>
    %cst = arith.constant 0.000000e+00 : f32
    %5 = vector.broadcast %cst : f32 to vector<64x128xf32>
    %c0_i32_4 = arith.constant 0 : i32
    %6 = vector.broadcast %c0_i32_4 : i32 to vector<64x1xi32>
    %7 = arith.cmpi eq, %3, %6 : vector<64x1xi32>
    %8 = vector.extract_strided_slice %4 {offsets = [0, 0], sizes = [1, 128], strides = [1, 1]} : vector<16x128xf32> to vector<1x128xf32>
    %cst_5 = arith.constant 0.000000e+00 : f32
    %9 = vector.shape_cast %7 : vector<64x1xi1> to vector<64x1xi1>
    %10 = vector.broadcast %9 : vector<64x1xi1> to vector<64x128xi1>
    %11 = vector.shape_cast %8 : vector<1x128xf32> to vector<1x128xf32>
    %12 = vector.broadcast %11 : vector<1x128xf32> to vector<64x128xf32>
    %13 = vector.broadcast %cst_5 : f32 to vector<64x128xf32>
    %14 = arith.select %10, %12, %13 : vector<64x128xi1>, vector<64x128xf32>
    %15 = arith.addf %5, %14 : vector<64x128xf32>
    %c1_i32 = arith.constant 1 : i32
    %16 = vector.broadcast %c1_i32 : i32 to vector<64x1xi32>
    %17 = arith.cmpi eq, %3, %16 : vector<64x1xi32>
    %18 = vector.extract_strided_slice %4 {offsets = [1, 0], sizes = [1, 128], strides = [1, 1]} : vector<16x128xf32> to vector<1x128xf32>
    %cst_6 = arith.constant 0.000000e+00 : f32
    %19 = vector.shape_cast %17 : vector<64x1xi1> to vector<64x1xi1>
    %20 = vector.broadcast %19 : vector<64x1xi1> to vector<64x128xi1>
    %21 = vector.shape_cast %18 : vector<1x128xf32> to vector<1x128xf32>
    %22 = vector.broadcast %21 : vector<1x128xf32> to vector<64x128xf32>
    %23 = vector.broadcast %cst_6 : f32 to vector<64x128xf32>
    %24 = arith.select %20, %22, %23 : vector<64x128xi1>, vector<64x128xf32>
    %25 = arith.addf %15, %24 : vector<64x128xf32>
    %c2_i32 = arith.constant 2 : i32
    %26 = vector.broadcast %c2_i32 : i32 to vector<64x1xi32>
    %27 = arith.cmpi eq, %3, %26 : vector<64x1xi32>
    %28 = vector.extract_strided_slice %4 {offsets = [2, 0], sizes = [1, 128], strides = [1, 1]} : vector<16x128xf32> to vector<1x128xf32>
    %cst_7 = arith.constant 0.000000e+00 : f32
    %29 = vector.shape_cast %27 : vector<64x1xi1> to vector<64x1xi1>
    %30 = vector.broadcast %29 : vector<64x1xi1> to vector<64x128xi1>
    %31 = vector.shape_cast %28 : vector<1x128xf32> to vector<1x128xf32>
    %32 = vector.broadcast %31 : vector<1x128xf32> to vector<64x128xf32>
    %33 = vector.broadcast %cst_7 : f32 to vector<64x128xf32>
    %34 = arith.select %30, %32, %33 : vector<64x128xi1>, vector<64x128xf32>
    %35 = arith.addf %25, %34 : vector<64x128xf32>
    %c3_i32 = arith.constant 3 : i32
    %36 = vector.broadcast %c3_i32 : i32 to vector<64x1xi32>
    %37 = arith.cmpi eq, %3, %36 : vector<64x1xi32>
    %38 = vector.extract_strided_slice %4 {offsets = [3, 0], sizes = [1, 128], strides = [1, 1]} : vector<16x128xf32> to vector<1x128xf32>
    %cst_8 = arith.constant 0.000000e+00 : f32
    %39 = vector.shape_cast %37 : vector<64x1xi1> to vector<64x1xi1>
    %40 = vector.broadcast %39 : vector<64x1xi1> to vector<64x128xi1>
    %41 = vector.shape_cast %38 : vector<1x128xf32> to vector<1x128xf32>
    %42 = vector.broadcast %41 : vector<1x128xf32> to vector<64x128xf32>
    %43 = vector.broadcast %cst_8 : f32 to vector<64x128xf32>
    %44 = arith.select %40, %42, %43 : vector<64x128xi1>, vector<64x128xf32>
    %45 = arith.addf %35, %44 : vector<64x128xf32>
    %c4_i32 = arith.constant 4 : i32
    %46 = vector.broadcast %c4_i32 : i32 to vector<64x1xi32>
    %47 = arith.cmpi eq, %3, %46 : vector<64x1xi32>
    %48 = vector.extract_strided_slice %4 {offsets = [4, 0], sizes = [1, 128], strides = [1, 1]} : vector<16x128xf32> to vector<1x128xf32>
    %cst_9 = arith.constant 0.000000e+00 : f32
    %49 = vector.shape_cast %47 : vector<64x1xi1> to vector<64x1xi1>
    %50 = vector.broadcast %49 : vector<64x1xi1> to vector<64x128xi1>
    %51 = vector.shape_cast %48 : vector<1x128xf32> to vector<1x128xf32>
    %52 = vector.broadcast %51 : vector<1x128xf32> to vector<64x128xf32>
    %53 = vector.broadcast %cst_9 : f32 to vector<64x128xf32>
    %54 = arith.select %50, %52, %53 : vector<64x128xi1>, vector<64x128xf32>
    %55 = arith.addf %45, %54 : vector<64x128xf32>
    %c5_i32 = arith.constant 5 : i32
    %56 = vector.broadcast %c5_i32 : i32 to vector<64x1xi32>
    %57 = arith.cmpi eq, %3, %56 : vector<64x1xi32>
    %58 = vector.extract_strided_slice %4 {offsets = [5, 0], sizes = [1, 128], strides = [1, 1]} : vector<16x128xf32> to vector<1x128xf32>
    %cst_10 = arith.constant 0.000000e+00 : f32
    %59 = vector.shape_cast %57 : vector<64x1xi1> to vector<64x1xi1>
    %60 = vector.broadcast %59 : vector<64x1xi1> to vector<64x128xi1>
    %61 = vector.shape_cast %58 : vector<1x128xf32> to vector<1x128xf32>
    %62 = vector.broadcast %61 : vector<1x128xf32> to vector<64x128xf32>
    %63 = vector.broadcast %cst_10 : f32 to vector<64x128xf32>
    %64 = arith.select %60, %62, %63 : vector<64x128xi1>, vector<64x128xf32>
    %65 = arith.addf %55, %64 : vector<64x128xf32>
    %c6_i32 = arith.constant 6 : i32
    %66 = vector.broadcast %c6_i32 : i32 to vector<64x1xi32>
    %67 = arith.cmpi eq, %3, %66 : vector<64x1xi32>
    %68 = vector.extract_strided_slice %4 {offsets = [6, 0], sizes = [1, 128], strides = [1, 1]} : vector<16x128xf32> to vector<1x128xf32>
    %cst_11 = arith.constant 0.000000e+00 : f32
    %69 = vector.shape_cast %67 : vector<64x1xi1> to vector<64x1xi1>
    %70 = vector.broadcast %69 : vector<64x1xi1> to vector<64x128xi1>
    %71 = vector.shape_cast %68 : vector<1x128xf32> to vector<1x128xf32>
    %72 = vector.broadcast %71 : vector<1x128xf32> to vector<64x128xf32>
    %73 = vector.broadcast %cst_11 : f32 to vector<64x128xf32>
    %74 = arith.select %70, %72, %73 : vector<64x128xi1>, vector<64x128xf32>
    %75 = arith.addf %65, %74 : vector<64x128xf32>
    %c7_i32 = arith.constant 7 : i32
    %76 = vector.broadcast %c7_i32 : i32 to vector<64x1xi32>
    %77 = arith.cmpi eq, %3, %76 : vector<64x1xi32>
    %78 = vector.extract_strided_slice %4 {offsets = [7, 0], sizes = [1, 128], strides = [1, 1]} : vector<16x128xf32> to vector<1x128xf32>
    %cst_12 = arith.constant 0.000000e+00 : f32
    %79 = vector.shape_cast %77 : vector<64x1xi1> to vector<64x1xi1>
    %80 = vector.broadcast %79 : vector<64x1xi1> to vector<64x128xi1>
    %81 = vector.shape_cast %78 : vector<1x128xf32> to vector<1x128xf32>
    %82 = vector.broadcast %81 : vector<1x128xf32> to vector<64x128xf32>
    %83 = vector.broadcast %cst_12 : f32 to vector<64x128xf32>
    %84 = arith.select %80, %82, %83 : vector<64x128xi1>, vector<64x128xf32>
    %85 = arith.addf %75, %84 : vector<64x128xf32>
    %c8_i32 = arith.constant 8 : i32
    %86 = vector.broadcast %c8_i32 : i32 to vector<64x1xi32>
    %87 = arith.cmpi eq, %3, %86 : vector<64x1xi32>
    %88 = vector.extract_strided_slice %4 {offsets = [8, 0], sizes = [1, 128], strides = [1, 1]} : vector<16x128xf32> to vector<1x128xf32>
    %cst_13 = arith.constant 0.000000e+00 : f32
    %89 = vector.shape_cast %87 : vector<64x1xi1> to vector<64x1xi1>
    %90 = vector.broadcast %89 : vector<64x1xi1> to vector<64x128xi1>
    %91 = vector.shape_cast %88 : vector<1x128xf32> to vector<1x128xf32>
    %92 = vector.broadcast %91 : vector<1x128xf32> to vector<64x128xf32>
    %93 = vector.broadcast %cst_13 : f32 to vector<64x128xf32>
    %94 = arith.select %90, %92, %93 : vector<64x128xi1>, vector<64x128xf32>
    %95 = arith.addf %85, %94 : vector<64x128xf32>
    %c9_i32 = arith.constant 9 : i32
    %96 = vector.broadcast %c9_i32 : i32 to vector<64x1xi32>
    %97 = arith.cmpi eq, %3, %96 : vector<64x1xi32>
    %98 = vector.extract_strided_slice %4 {offsets = [9, 0], sizes = [1, 128], strides = [1, 1]} : vector<16x128xf32> to vector<1x128xf32>
    %cst_14 = arith.constant 0.000000e+00 : f32
    %99 = vector.shape_cast %97 : vector<64x1xi1> to vector<64x1xi1>
    %100 = vector.broadcast %99 : vector<64x1xi1> to vector<64x128xi1>
    %101 = vector.shape_cast %98 : vector<1x128xf32> to vector<1x128xf32>
    %102 = vector.broadcast %101 : vector<1x128xf32> to vector<64x128xf32>
    %103 = vector.broadcast %cst_14 : f32 to vector<64x128xf32>
    %104 = arith.select %100, %102, %103 : vector<64x128xi1>, vector<64x128xf32>
    %105 = arith.addf %95, %104 : vector<64x128xf32>
    %c10_i32 = arith.constant 10 : i32
    %106 = vector.broadcast %c10_i32 : i32 to vector<64x1xi32>
    %107 = arith.cmpi eq, %3, %106 : vector<64x1xi32>
    %108 = vector.extract_strided_slice %4 {offsets = [10, 0], sizes = [1, 128], strides = [1, 1]} : vector<16x128xf32> to vector<1x128xf32>
    %cst_15 = arith.constant 0.000000e+00 : f32
    %109 = vector.shape_cast %107 : vector<64x1xi1> to vector<64x1xi1>
    %110 = vector.broadcast %109 : vector<64x1xi1> to vector<64x128xi1>
    %111 = vector.shape_cast %108 : vector<1x128xf32> to vector<1x128xf32>
    %112 = vector.broadcast %111 : vector<1x128xf32> to vector<64x128xf32>
    %113 = vector.broadcast %cst_15 : f32 to vector<64x128xf32>
    %114 = arith.select %110, %112, %113 : vector<64x128xi1>, vector<64x128xf32>
    %115 = arith.addf %105, %114 : vector<64x128xf32>
    %c11_i32 = arith.constant 11 : i32
    %116 = vector.broadcast %c11_i32 : i32 to vector<64x1xi32>
    %117 = arith.cmpi eq, %3, %116 : vector<64x1xi32>
    %118 = vector.extract_strided_slice %4 {offsets = [11, 0], sizes = [1, 128], strides = [1, 1]} : vector<16x128xf32> to vector<1x128xf32>
    %cst_16 = arith.constant 0.000000e+00 : f32
    %119 = vector.shape_cast %117 : vector<64x1xi1> to vector<64x1xi1>
    %120 = vector.broadcast %119 : vector<64x1xi1> to vector<64x128xi1>
    %121 = vector.shape_cast %118 : vector<1x128xf32> to vector<1x128xf32>
    %122 = vector.broadcast %121 : vector<1x128xf32> to vector<64x128xf32>
    %123 = vector.broadcast %cst_16 : f32 to vector<64x128xf32>
    %124 = arith.select %120, %122, %123 : vector<64x128xi1>, vector<64x128xf32>
    %125 = arith.addf %115, %124 : vector<64x128xf32>
    %c12_i32 = arith.constant 12 : i32
    %126 = vector.broadcast %c12_i32 : i32 to vector<64x1xi32>
    %127 = arith.cmpi eq, %3, %126 : vector<64x1xi32>
    %128 = vector.extract_strided_slice %4 {offsets = [12, 0], sizes = [1, 128], strides = [1, 1]} : vector<16x128xf32> to vector<1x128xf32>
    %cst_17 = arith.constant 0.000000e+00 : f32
    %129 = vector.shape_cast %127 : vector<64x1xi1> to vector<64x1xi1>
    %130 = vector.broadcast %129 : vector<64x1xi1> to vector<64x128xi1>
    %131 = vector.shape_cast %128 : vector<1x128xf32> to vector<1x128xf32>
    %132 = vector.broadcast %131 : vector<1x128xf32> to vector<64x128xf32>
    %133 = vector.broadcast %cst_17 : f32 to vector<64x128xf32>
    %134 = arith.select %130, %132, %133 : vector<64x128xi1>, vector<64x128xf32>
    %135 = arith.addf %125, %134 : vector<64x128xf32>
    %c13_i32 = arith.constant 13 : i32
    %136 = vector.broadcast %c13_i32 : i32 to vector<64x1xi32>
    %137 = arith.cmpi eq, %3, %136 : vector<64x1xi32>
    %138 = vector.extract_strided_slice %4 {offsets = [13, 0], sizes = [1, 128], strides = [1, 1]} : vector<16x128xf32> to vector<1x128xf32>
    %cst_18 = arith.constant 0.000000e+00 : f32
    %139 = vector.shape_cast %137 : vector<64x1xi1> to vector<64x1xi1>
    %140 = vector.broadcast %139 : vector<64x1xi1> to vector<64x128xi1>
    %141 = vector.shape_cast %138 : vector<1x128xf32> to vector<1x128xf32>
    %142 = vector.broadcast %141 : vector<1x128xf32> to vector<64x128xf32>
    %143 = vector.broadcast %cst_18 : f32 to vector<64x128xf32>
    %144 = arith.select %140, %142, %143 : vector<64x128xi1>, vector<64x128xf32>
    %145 = arith.addf %135, %144 : vector<64x128xf32>
    %c14_i32 = arith.constant 14 : i32
    %146 = vector.broadcast %c14_i32 : i32 to vector<64x1xi32>
    %147 = arith.cmpi eq, %3, %146 : vector<64x1xi32>
    %148 = vector.extract_strided_slice %4 {offsets = [14, 0], sizes = [1, 128], strides = [1, 1]} : vector<16x128xf32> to vector<1x128xf32>
    %cst_19 = arith.constant 0.000000e+00 : f32
    %149 = vector.shape_cast %147 : vector<64x1xi1> to vector<64x1xi1>
    %150 = vector.broadcast %149 : vector<64x1xi1> to vector<64x128xi1>
    %151 = vector.shape_cast %148 : vector<1x128xf32> to vector<1x128xf32>
    %152 = vector.broadcast %151 : vector<1x128xf32> to vector<64x128xf32>
    %153 = vector.broadcast %cst_19 : f32 to vector<64x128xf32>
    %154 = arith.select %150, %152, %153 : vector<64x128xi1>, vector<64x128xf32>
    %155 = arith.addf %145, %154 : vector<64x128xf32>
    %c15_i32 = arith.constant 15 : i32
    %156 = vector.broadcast %c15_i32 : i32 to vector<64x1xi32>
    %157 = arith.cmpi eq, %3, %156 : vector<64x1xi32>
    %158 = vector.extract_strided_slice %4 {offsets = [15, 0], sizes = [1, 128], strides = [1, 1]} : vector<16x128xf32> to vector<1x128xf32>
    %cst_20 = arith.constant 0.000000e+00 : f32
    %159 = vector.shape_cast %157 : vector<64x1xi1> to vector<64x1xi1>
    %160 = vector.broadcast %159 : vector<64x1xi1> to vector<64x128xi1>
    %161 = vector.shape_cast %158 : vector<1x128xf32> to vector<1x128xf32>
    %162 = vector.broadcast %161 : vector<1x128xf32> to vector<64x128xf32>
    %163 = vector.broadcast %cst_20 : f32 to vector<64x128xf32>
    %164 = arith.select %160, %162, %163 : vector<64x128xi1>, vector<64x128xf32>
    %165 = arith.addf %155, %164 : vector<64x128xf32>
    %c0_21 = arith.constant 0 : index
    %c0_22 = arith.constant 0 : index
    %166 = vector.load %arg7[%c0_21, %c0_22] : memref<64x128xf32, #tpu.memory_space<vmem>>, vector<64x128xf32>
    tpu.vector_store %arg7[%c0_21, %c0_22], %165 {strides = array<i32>} : memref<64x128xf32, #tpu.memory_space<vmem>>, vector<64x128xf32>,
    %c0_23 = arith.constant 0 : index
    %c0_24 = arith.constant 0 : index
    %167 = vector.load %arg3[%c0_23, %c0_24] : memref<32x128xf32, #tpu.memory_space<vmem>>, vector<32x128xf32>
    %c0_25 = arith.constant 0 : index
    %c0_26 = arith.constant 0 : index
    %168 = vector.load %arg5[%c0_25, %c0_26] : memref<8x32xf32, #tpu.memory_space<vmem>>, vector<8x32xf32>
    %c0_27 = arith.constant 0 : index
    %c0_28 = arith.constant 0 : index
    %169 = vector.load %arg6[%c0_27, %c0_28] : memref<8x32xf32, #tpu.memory_space<vmem>>, vector<8x32xf32>
    %c0_i32_29 = arith.constant 0 : i32
    %c8_i32_30 = arith.constant 8 : i32
    %170 = arith.muli %c0_i32_29, %c8_i32_30 : i32
    %171 = tpu.assume_multiple %170, 8 : i32
    %172 = arith.index_cast %171 : i32 to index
    %c0_31 = arith.constant 0 : index
    %173 = vector.load %arg7[%172, %c0_31] : memref<64x128xf32, #tpu.memory_space<vmem>>, vector<8x128xf32>
    %cst_32 = arith.constant dense<0.000000e+00> : vector<8x128xf32>
    %174 = tpu.matmul %168, %167, %cst_32 {dimension_numbers = #tpu.dot_dimension_numbers<[1], [0], [0], [1], [0, 0, 1, 1], [], []>} : vector<8x32xf32>, vector<32x128xf32>, vector<8x128xf32> -> vector<8x128xf32>
    %175 = arith.addf %173, %174 : vector<8x128xf32>
    %176 = vector.extract_strided_slice %175 {offsets = [0, 0], sizes = [8, 96], strides = [1, 1]} : vector<8x128xf32> to vector<8x96xf32>
    %177 = arith.negf %176 : vector<8x96xf32>
    %178 = math.exp %177 : vector<8x96xf32>
    %cst_33 = arith.constant 1.000000e+00 : f32
    %179 = vector.broadcast %cst_33 : f32 to vector<8x96xf32>
    %180 = arith.addf %179, %178 : vector<8x96xf32>
    %181 = arith.divf %179, %180 : vector<8x96xf32>
    %182 = vector.extract_strided_slice %175 {offsets = [0, 96], sizes = [8, 32], strides = [1, 1]} : vector<8x128xf32> to vector<8x32xf32>
    %183 = math.tanh %182 : vector<8x32xf32>
    %184 = vector.extract_strided_slice %181 {offsets = [0, 0], sizes = [8, 32], strides = [1, 1]} : vector<8x96xf32> to vector<8x32xf32>
    %185 = vector.extract_strided_slice %181 {offsets = [0, 32], sizes = [8, 32], strides = [1, 1]} : vector<8x96xf32> to vector<8x32xf32>
    %186 = vector.extract_strided_slice %181 {offsets = [0, 64], sizes = [8, 32], strides = [1, 1]} : vector<8x96xf32> to vector<8x32xf32>
    %187 = arith.mulf %185, %169 : vector<8x32xf32>
    %188 = arith.mulf %184, %183 : vector<8x32xf32>
    %189 = arith.addf %187, %188 : vector<8x32xf32>
    %190 = math.tanh %189 : vector<8x32xf32>
    %191 = arith.mulf %186, %190 : vector<8x32xf32>
    %192 = arith.index_cast %171 : i32 to index
    %c0_34 = arith.constant 0 : index
    %193 = vector.load %arg8[%192, %c0_34] : memref<64x32xf32, #tpu.memory_space<vmem>>, vector<8x32xf32>
    tpu.vector_store %arg8[%192, %c0_34], %191 {strides = array<i32>} : memref<64x32xf32, #tpu.memory_space<vmem>>, vector<8x32xf32>,
    %c1_i32_35 = arith.constant 1 : i32
    %c8_i32_36 = arith.constant 8 : i32
    %194 = arith.muli %c1_i32_35, %c8_i32_36 : i32
    %195 = tpu.assume_multiple %194, 8 : i32
    %196 = arith.index_cast %195 : i32 to index
    %c0_37 = arith.constant 0 : index
    %197 = vector.load %arg7[%196, %c0_37] : memref<64x128xf32, #tpu.memory_space<vmem>>, vector<8x128xf32>
    %cst_38 = arith.constant dense<0.000000e+00> : vector<8x128xf32>
    %198 = tpu.matmul %191, %167, %cst_38 {dimension_numbers = #tpu.dot_dimension_numbers<[1], [0], [0], [1], [0, 0, 1, 1], [], []>} : vector<8x32xf32>, vector<32x128xf32>, vector<8x128xf32> -> vector<8x128xf32>
    %199 = arith.addf %197, %198 : vector<8x128xf32>
    %200 = vector.extract_strided_slice %199 {offsets = [0, 0], sizes = [8, 96], strides = [1, 1]} : vector<8x128xf32> to vector<8x96xf32>
    %201 = arith.negf %200 : vector<8x96xf32>
    %202 = math.exp %201 : vector<8x96xf32>
    %cst_39 = arith.constant 1.000000e+00 : f32
    %203 = vector.broadcast %cst_39 : f32 to vector<8x96xf32>
    %204 = arith.addf %203, %202 : vector<8x96xf32>
    %205 = arith.divf %203, %204 : vector<8x96xf32>
    %206 = vector.extract_strided_slice %199 {offsets = [0, 96], sizes = [8, 32], strides = [1, 1]} : vector<8x128xf32> to vector<8x32xf32>
    %207 = math.tanh %206 : vector<8x32xf32>
    %208 = vector.extract_strided_slice %205 {offsets = [0, 0], sizes = [8, 32], strides = [1, 1]} : vector<8x96xf32> to vector<8x32xf32>
    %209 = vector.extract_strided_slice %205 {offsets = [0, 32], sizes = [8, 32], strides = [1, 1]} : vector<8x96xf32> to vector<8x32xf32>
    %210 = vector.extract_strided_slice %205 {offsets = [0, 64], sizes = [8, 32], strides = [1, 1]} : vector<8x96xf32> to vector<8x32xf32>
    %211 = arith.mulf %209, %189 : vector<8x32xf32>
    %212 = arith.mulf %208, %207 : vector<8x32xf32>
    %213 = arith.addf %211, %212 : vector<8x32xf32>
    %214 = math.tanh %213 : vector<8x32xf32>
    %215 = arith.mulf %210, %214 : vector<8x32xf32>
    %216 = arith.index_cast %195 : i32 to index
    %c0_40 = arith.constant 0 : index
    %217 = vector.load %arg8[%216, %c0_40] : memref<64x32xf32, #tpu.memory_space<vmem>>, vector<8x32xf32>
    tpu.vector_store %arg8[%216, %c0_40], %215 {strides = array<i32>} : memref<64x32xf32, #tpu.memory_space<vmem>>, vector<8x32xf32>,
    %c2_i32_41 = arith.constant 2 : i32
    %c8_i32_42 = arith.constant 8 : i32
    %218 = arith.muli %c2_i32_41, %c8_i32_42 : i32
    %219 = tpu.assume_multiple %218, 8 : i32
    %220 = arith.index_cast %219 : i32 to index
    %c0_43 = arith.constant 0 : index
    %221 = vector.load %arg7[%220, %c0_43] : memref<64x128xf32, #tpu.memory_space<vmem>>, vector<8x128xf32>
    %cst_44 = arith.constant dense<0.000000e+00> : vector<8x128xf32>
    %222 = tpu.matmul %215, %167, %cst_44 {dimension_numbers = #tpu.dot_dimension_numbers<[1], [0], [0], [1], [0, 0, 1, 1], [], []>} : vector<8x32xf32>, vector<32x128xf32>, vector<8x128xf32> -> vector<8x128xf32>
    %223 = arith.addf %221, %222 : vector<8x128xf32>
    %224 = vector.extract_strided_slice %223 {offsets = [0, 0], sizes = [8, 96], strides = [1, 1]} : vector<8x128xf32> to vector<8x96xf32>
    %225 = arith.negf %224 : vector<8x96xf32>
    %226 = math.exp %225 : vector<8x96xf32>
    %cst_45 = arith.constant 1.000000e+00 : f32
    %227 = vector.broadcast %cst_45 : f32 to vector<8x96xf32>
    %228 = arith.addf %227, %226 : vector<8x96xf32>
    %229 = arith.divf %227, %228 : vector<8x96xf32>
    %230 = vector.extract_strided_slice %223 {offsets = [0, 96], sizes = [8, 32], strides = [1, 1]} : vector<8x128xf32> to vector<8x32xf32>
    %231 = math.tanh %230 : vector<8x32xf32>
    %232 = vector.extract_strided_slice %229 {offsets = [0, 0], sizes = [8, 32], strides = [1, 1]} : vector<8x96xf32> to vector<8x32xf32>
    %233 = vector.extract_strided_slice %229 {offsets = [0, 32], sizes = [8, 32], strides = [1, 1]} : vector<8x96xf32> to vector<8x32xf32>
    %234 = vector.extract_strided_slice %229 {offsets = [0, 64], sizes = [8, 32], strides = [1, 1]} : vector<8x96xf32> to vector<8x32xf32>
    %235 = arith.mulf %233, %213 : vector<8x32xf32>
    %236 = arith.mulf %232, %231 : vector<8x32xf32>
    %237 = arith.addf %235, %236 : vector<8x32xf32>
    %238 = math.tanh %237 : vector<8x32xf32>
    %239 = arith.mulf %234, %238 : vector<8x32xf32>
    %240 = arith.index_cast %219 : i32 to index
    %c0_46 = arith.constant 0 : index
    %241 = vector.load %arg8[%240, %c0_46] : memref<64x32xf32, #tpu.memory_space<vmem>>, vector<8x32xf32>
    tpu.vector_store %arg8[%240, %c0_46], %239 {strides = array<i32>} : memref<64x32xf32, #tpu.memory_space<vmem>>, vector<8x32xf32>,
    %c3_i32_47 = arith.constant 3 : i32
    %c8_i32_48 = arith.constant 8 : i32
    %242 = arith.muli %c3_i32_47, %c8_i32_48 : i32
    %243 = tpu.assume_multiple %242, 8 : i32
    %244 = arith.index_cast %243 : i32 to index
    %c0_49 = arith.constant 0 : index
    %245 = vector.load %arg7[%244, %c0_49] : memref<64x128xf32, #tpu.memory_space<vmem>>, vector<8x128xf32>
    %cst_50 = arith.constant dense<0.000000e+00> : vector<8x128xf32>
    %246 = tpu.matmul %239, %167, %cst_50 {dimension_numbers = #tpu.dot_dimension_numbers<[1], [0], [0], [1], [0, 0, 1, 1], [], []>} : vector<8x32xf32>, vector<32x128xf32>, vector<8x128xf32> -> vector<8x128xf32>
    %247 = arith.addf %245, %246 : vector<8x128xf32>
    %248 = vector.extract_strided_slice %247 {offsets = [0, 0], sizes = [8, 96], strides = [1, 1]} : vector<8x128xf32> to vector<8x96xf32>
    %249 = arith.negf %248 : vector<8x96xf32>
    %250 = math.exp %249 : vector<8x96xf32>
    %cst_51 = arith.constant 1.000000e+00 : f32
    %251 = vector.broadcast %cst_51 : f32 to vector<8x96xf32>
    %252 = arith.addf %251, %250 : vector<8x96xf32>
    %253 = arith.divf %251, %252 : vector<8x96xf32>
    %254 = vector.extract_strided_slice %247 {offsets = [0, 96], sizes = [8, 32], strides = [1, 1]} : vector<8x128xf32> to vector<8x32xf32>
    %255 = math.tanh %254 : vector<8x32xf32>
    %256 = vector.extract_strided_slice %253 {offsets = [0, 0], sizes = [8, 32], strides = [1, 1]} : vector<8x96xf32> to vector<8x32xf32>
    %257 = vector.extract_strided_slice %253 {offsets = [0, 32], sizes = [8, 32], strides = [1, 1]} : vector<8x96xf32> to vector<8x32xf32>
    %258 = vector.extract_strided_slice %253 {offsets = [0, 64], sizes = [8, 32], strides = [1, 1]} : vector<8x96xf32> to vector<8x32xf32>
    %259 = arith.mulf %257, %237 : vector<8x32xf32>
    %260 = arith.mulf %256, %255 : vector<8x32xf32>
    %261 = arith.addf %259, %260 : vector<8x32xf32>
    %262 = math.tanh %261 : vector<8x32xf32>
    %263 = arith.mulf %258, %262 : vector<8x32xf32>
    %264 = arith.index_cast %243 : i32 to index
    %c0_52 = arith.constant 0 : index
    %265 = vector.load %arg8[%264, %c0_52] : memref<64x32xf32, #tpu.memory_space<vmem>>, vector<8x32xf32>
    tpu.vector_store %arg8[%264, %c0_52], %263 {strides = array<i32>} : memref<64x32xf32, #tpu.memory_space<vmem>>, vector<8x32xf32>,
    %c4_i32_53 = arith.constant 4 : i32
    %c8_i32_54 = arith.constant 8 : i32
    %266 = arith.muli %c4_i32_53, %c8_i32_54 : i32
    %267 = tpu.assume_multiple %266, 8 : i32
    %268 = arith.index_cast %267 : i32 to index
    %c0_55 = arith.constant 0 : index
    %269 = vector.load %arg7[%268, %c0_55] : memref<64x128xf32, #tpu.memory_space<vmem>>, vector<8x128xf32>
    %cst_56 = arith.constant dense<0.000000e+00> : vector<8x128xf32>
    %270 = tpu.matmul %263, %167, %cst_56 {dimension_numbers = #tpu.dot_dimension_numbers<[1], [0], [0], [1], [0, 0, 1, 1], [], []>} : vector<8x32xf32>, vector<32x128xf32>, vector<8x128xf32> -> vector<8x128xf32>
    %271 = arith.addf %269, %270 : vector<8x128xf32>
    %272 = vector.extract_strided_slice %271 {offsets = [0, 0], sizes = [8, 96], strides = [1, 1]} : vector<8x128xf32> to vector<8x96xf32>
    %273 = arith.negf %272 : vector<8x96xf32>
    %274 = math.exp %273 : vector<8x96xf32>
    %cst_57 = arith.constant 1.000000e+00 : f32
    %275 = vector.broadcast %cst_57 : f32 to vector<8x96xf32>
    %276 = arith.addf %275, %274 : vector<8x96xf32>
    %277 = arith.divf %275, %276 : vector<8x96xf32>
    %278 = vector.extract_strided_slice %271 {offsets = [0, 96], sizes = [8, 32], strides = [1, 1]} : vector<8x128xf32> to vector<8x32xf32>
    %279 = math.tanh %278 : vector<8x32xf32>
    %280 = vector.extract_strided_slice %277 {offsets = [0, 0], sizes = [8, 32], strides = [1, 1]} : vector<8x96xf32> to vector<8x32xf32>
    %281 = vector.extract_strided_slice %277 {offsets = [0, 32], sizes = [8, 32], strides = [1, 1]} : vector<8x96xf32> to vector<8x32xf32>
    %282 = vector.extract_strided_slice %277 {offsets = [0, 64], sizes = [8, 32], strides = [1, 1]} : vector<8x96xf32> to vector<8x32xf32>
    %283 = arith.mulf %281, %261 : vector<8x32xf32>
    %284 = arith.mulf %280, %279 : vector<8x32xf32>
    %285 = arith.addf %283, %284 : vector<8x32xf32>
    %286 = math.tanh %285 : vector<8x32xf32>
    %287 = arith.mulf %282, %286 : vector<8x32xf32>
    %288 = arith.index_cast %267 : i32 to index
    %c0_58 = arith.constant 0 : index
    %289 = vector.load %arg8[%288, %c0_58] : memref<64x32xf32, #tpu.memory_space<vmem>>, vector<8x32xf32>
    tpu.vector_store %arg8[%288, %c0_58], %287 {strides = array<i32>} : memref<64x32xf32, #tpu.memory_space<vmem>>, vector<8x32xf32>,
    %c5_i32_59 = arith.constant 5 : i32
    %c8_i32_60 = arith.constant 8 : i32
    %290 = arith.muli %c5_i32_59, %c8_i32_60 : i32
    %291 = tpu.assume_multiple %290, 8 : i32
    %292 = arith.index_cast %291 : i32 to index
    %c0_61 = arith.constant 0 : index
    %293 = vector.load %arg7[%292, %c0_61] : memref<64x128xf32, #tpu.memory_space<vmem>>, vector<8x128xf32>
    %cst_62 = arith.constant dense<0.000000e+00> : vector<8x128xf32>
    %294 = tpu.matmul %287, %167, %cst_62 {dimension_numbers = #tpu.dot_dimension_numbers<[1], [0], [0], [1], [0, 0, 1, 1], [], []>} : vector<8x32xf32>, vector<32x128xf32>, vector<8x128xf32> -> vector<8x128xf32>
    %295 = arith.addf %293, %294 : vector<8x128xf32>
    %296 = vector.extract_strided_slice %295 {offsets = [0, 0], sizes = [8, 96], strides = [1, 1]} : vector<8x128xf32> to vector<8x96xf32>
    %297 = arith.negf %296 : vector<8x96xf32>
    %298 = math.exp %297 : vector<8x96xf32>
    %cst_63 = arith.constant 1.000000e+00 : f32
    %299 = vector.broadcast %cst_63 : f32 to vector<8x96xf32>
    %300 = arith.addf %299, %298 : vector<8x96xf32>
    %301 = arith.divf %299, %300 : vector<8x96xf32>
    %302 = vector.extract_strided_slice %295 {offsets = [0, 96], sizes = [8, 32], strides = [1, 1]} : vector<8x128xf32> to vector<8x32xf32>
    %303 = math.tanh %302 : vector<8x32xf32>
    %304 = vector.extract_strided_slice %301 {offsets = [0, 0], sizes = [8, 32], strides = [1, 1]} : vector<8x96xf32> to vector<8x32xf32>
    %305 = vector.extract_strided_slice %301 {offsets = [0, 32], sizes = [8, 32], strides = [1, 1]} : vector<8x96xf32> to vector<8x32xf32>
    %306 = vector.extract_strided_slice %301 {offsets = [0, 64], sizes = [8, 32], strides = [1, 1]} : vector<8x96xf32> to vector<8x32xf32>
    %307 = arith.mulf %305, %285 : vector<8x32xf32>
    %308 = arith.mulf %304, %303 : vector<8x32xf32>
    %309 = arith.addf %307, %308 : vector<8x32xf32>
    %310 = math.tanh %309 : vector<8x32xf32>
    %311 = arith.mulf %306, %310 : vector<8x32xf32>
    %312 = arith.index_cast %291 : i32 to index
    %c0_64 = arith.constant 0 : index
    %313 = vector.load %arg8[%312, %c0_64] : memref<64x32xf32, #tpu.memory_space<vmem>>, vector<8x32xf32>
    tpu.vector_store %arg8[%312, %c0_64], %311 {strides = array<i32>} : memref<64x32xf32, #tpu.memory_space<vmem>>, vector<8x32xf32>,
    %c6_i32_65 = arith.constant 6 : i32
    %c8_i32_66 = arith.constant 8 : i32
    %314 = arith.muli %c6_i32_65, %c8_i32_66 : i32
    %315 = tpu.assume_multiple %314, 8 : i32
    %316 = arith.index_cast %315 : i32 to index
    %c0_67 = arith.constant 0 : index
    %317 = vector.load %arg7[%316, %c0_67] : memref<64x128xf32, #tpu.memory_space<vmem>>, vector<8x128xf32>
    %cst_68 = arith.constant dense<0.000000e+00> : vector<8x128xf32>
    %318 = tpu.matmul %311, %167, %cst_68 {dimension_numbers = #tpu.dot_dimension_numbers<[1], [0], [0], [1], [0, 0, 1, 1], [], []>} : vector<8x32xf32>, vector<32x128xf32>, vector<8x128xf32> -> vector<8x128xf32>
    %319 = arith.addf %317, %318 : vector<8x128xf32>
    %320 = vector.extract_strided_slice %319 {offsets = [0, 0], sizes = [8, 96], strides = [1, 1]} : vector<8x128xf32> to vector<8x96xf32>
    %321 = arith.negf %320 : vector<8x96xf32>
    %322 = math.exp %321 : vector<8x96xf32>
    %cst_69 = arith.constant 1.000000e+00 : f32
    %323 = vector.broadcast %cst_69 : f32 to vector<8x96xf32>
    %324 = arith.addf %323, %322 : vector<8x96xf32>
    %325 = arith.divf %323, %324 : vector<8x96xf32>
    %326 = vector.extract_strided_slice %319 {offsets = [0, 96], sizes = [8, 32], strides = [1, 1]} : vector<8x128xf32> to vector<8x32xf32>
    %327 = math.tanh %326 : vector<8x32xf32>
    %328 = vector.extract_strided_slice %325 {offsets = [0, 0], sizes = [8, 32], strides = [1, 1]} : vector<8x96xf32> to vector<8x32xf32>
    %329 = vector.extract_strided_slice %325 {offsets = [0, 32], sizes = [8, 32], strides = [1, 1]} : vector<8x96xf32> to vector<8x32xf32>
    %330 = vector.extract_strided_slice %325 {offsets = [0, 64], sizes = [8, 32], strides = [1, 1]} : vector<8x96xf32> to vector<8x32xf32>
    %331 = arith.mulf %329, %309 : vector<8x32xf32>
    %332 = arith.mulf %328, %327 : vector<8x32xf32>
    %333 = arith.addf %331, %332 : vector<8x32xf32>
    %334 = math.tanh %333 : vector<8x32xf32>
    %335 = arith.mulf %330, %334 : vector<8x32xf32>
    %336 = arith.index_cast %315 : i32 to index
    %c0_70 = arith.constant 0 : index
    %337 = vector.load %arg8[%336, %c0_70] : memref<64x32xf32, #tpu.memory_space<vmem>>, vector<8x32xf32>
    tpu.vector_store %arg8[%336, %c0_70], %335 {strides = array<i32>} : memref<64x32xf32, #tpu.memory_space<vmem>>, vector<8x32xf32>,
    %c7_i32_71 = arith.constant 7 : i32
    %c8_i32_72 = arith.constant 8 : i32
    %338 = arith.muli %c7_i32_71, %c8_i32_72 : i32
    %339 = tpu.assume_multiple %338, 8 : i32
    %340 = arith.index_cast %339 : i32 to index
    %c0_73 = arith.constant 0 : index
    %341 = vector.load %arg7[%340, %c0_73] : memref<64x128xf32, #tpu.memory_space<vmem>>, vector<8x128xf32>
    %cst_74 = arith.constant dense<0.000000e+00> : vector<8x128xf32>
    %342 = tpu.matmul %335, %167, %cst_74 {dimension_numbers = #tpu.dot_dimension_numbers<[1], [0], [0], [1], [0, 0, 1, 1], [], []>} : vector<8x32xf32>, vector<32x128xf32>, vector<8x128xf32> -> vector<8x128xf32>
    %343 = arith.addf %341, %342 : vector<8x128xf32>
    %344 = vector.extract_strided_slice %343 {offsets = [0, 0], sizes = [8, 96], strides = [1, 1]} : vector<8x128xf32> to vector<8x96xf32>
    %345 = arith.negf %344 : vector<8x96xf32>
    %346 = math.exp %345 : vector<8x96xf32>
    %cst_75 = arith.constant 1.000000e+00 : f32
    %347 = vector.broadcast %cst_75 : f32 to vector<8x96xf32>
    %348 = arith.addf %347, %346 : vector<8x96xf32>
    %349 = arith.divf %347, %348 : vector<8x96xf32>
    %350 = vector.extract_strided_slice %343 {offsets = [0, 96], sizes = [8, 32], strides = [1, 1]} : vector<8x128xf32> to vector<8x32xf32>
    %351 = math.tanh %350 : vector<8x32xf32>
    %352 = vector.extract_strided_slice %349 {offsets = [0, 0], sizes = [8, 32], strides = [1, 1]} : vector<8x96xf32> to vector<8x32xf32>
    %353 = vector.extract_strided_slice %349 {offsets = [0, 32], sizes = [8, 32], strides = [1, 1]} : vector<8x96xf32> to vector<8x32xf32>
    %354 = vector.extract_strided_slice %349 {offsets = [0, 64], sizes = [8, 32], strides = [1, 1]} : vector<8x96xf32> to vector<8x32xf32>
    %355 = arith.mulf %353, %333 : vector<8x32xf32>
    %356 = arith.mulf %352, %351 : vector<8x32xf32>
    %357 = arith.addf %355, %356 : vector<8x32xf32>
    %358 = math.tanh %357 : vector<8x32xf32>
    %359 = arith.mulf %354, %358 : vector<8x32xf32>
    %360 = arith.index_cast %339 : i32 to index
    %c0_76 = arith.constant 0 : index
    %361 = vector.load %arg8[%360, %c0_76] : memref<64x32xf32, #tpu.memory_space<vmem>>, vector<8x32xf32>
    tpu.vector_store %arg8[%360, %c0_76], %359 {strides = array<i32>} : memref<64x32xf32, #tpu.memory_space<vmem>>, vector<8x32xf32>,
    %c8_i32_77 = arith.constant 8 : i32
    %c0_78 = arith.constant 0 : index
    %c0_79 = arith.constant 0 : index
    %362 = vector.load %arg5[%c0_78, %c0_79] : memref<8x32xf32, #tpu.memory_space<vmem>>, vector<8x32xf32>
    tpu.vector_store %arg5[%c0_78, %c0_79], %359 {strides = array<i32>} : memref<8x32xf32, #tpu.memory_space<vmem>>, vector<8x32xf32>,
    %c0_80 = arith.constant 0 : index
    %c0_81 = arith.constant 0 : index
    %363 = vector.load %arg6[%c0_80, %c0_81] : memref<8x32xf32, #tpu.memory_space<vmem>>, vector<8x32xf32>
    tpu.vector_store %arg6[%c0_80, %c0_81], %357 {strides = array<i32>} : memref<8x32xf32, #tpu.memory_space<vmem>>, vector<8x32xf32>,
    %c0_82 = arith.constant 0 : index
    %c0_83 = arith.constant 0 : index
    %364 = tpu.strided_load %arg8[%c0_82, %c0_83] {strides = array<i32: 4, 1>} : memref<64x32xf32, #tpu.memory_space<vmem>>, vector<16x32xf32>
    %c1 = arith.constant 1 : index
    %c0_84 = arith.constant 0 : index
    %365 = tpu.strided_load %arg8[%c1, %c0_84] {strides = array<i32: 4, 1>} : memref<64x32xf32, #tpu.memory_space<vmem>>, vector<16x32xf32>
    %c2 = arith.constant 2 : index
    %c0_85 = arith.constant 0 : index
    %366 = tpu.strided_load %arg8[%c2, %c0_85] {strides = array<i32: 4, 1>} : memref<64x32xf32, #tpu.memory_space<vmem>>, vector<16x32xf32>
    %c3 = arith.constant 3 : index
    %c0_86 = arith.constant 0 : index
    %367 = tpu.strided_load %arg8[%c3, %c0_86] {strides = array<i32: 4, 1>} : memref<64x32xf32, #tpu.memory_space<vmem>>, vector<16x32xf32>
    %368 = tpu.concatenate %364, %365, %366, %367 in 1 : vector<16x32xf32>, vector<16x32xf32>, vector<16x32xf32>, vector<16x32xf32> -> vector<16x128xf32>
    %c0_87 = arith.constant 0 : index
    %c0_88 = arith.constant 0 : index
    %369 = vector.load %arg4[%c0_87, %c0_88] : memref<16x128xf32, #tpu.memory_space<vmem>>, vector<16x128xf32>
    tpu.vector_store %arg4[%c0_87, %c0_88], %368 {strides = array<i32>} : memref<16x128xf32, #tpu.memory_space<vmem>>, vector<16x128xf32>,
    return
  }
  func.func @transform_0(%arg0: i32) -> (i32, i32) {
    %c0_i32 = arith.constant 0 : i32
    %c0_i32_0 = arith.constant 0 : i32
    return %arg0, %c0_i32 : i32, i32
  }
  func.func @transform_1(%arg0: i32) -> (i32, i32) {
    %c0_i32 = arith.constant 0 : i32
    %c0_i32_0 = arith.constant 0 : i32
    %c0_i32_1 = arith.constant 0 : i32
    return %c0_i32, %c0_i32_0 : i32, i32
  }
  func.func @transform_2(%arg0: i32) -> (i32, i32) {
    %c0_i32 = arith.constant 0 : i32
    %c0_i32_0 = arith.constant 0 : i32
    %c0_i32_1 = arith.constant 0 : i32
    return %c0_i32, %c0_i32_0 : i32, i32
  }
  func.func @transform_3(%arg0: i32) -> (i32, i32) {
    %c0_i32 = arith.constant 0 : i32
    %c0_i32_0 = arith.constant 0 : i32
    return %arg0, %c0_i32 : i32, i32
  }
}

</mosaic_0001>

<llo_original>
// kernel: tpu_custom_call.1
$region0: #{tpu_custom_call.1}
  #allocation0 [shape = 'u32[]', space=smem, size = 0x4, offset = 0x4, fixed_abs, tag = 'smem constant byte address 0x4 - core index']
  #allocation1 [shape = 'u32[144,128]{1,0:T(1,128)}', space=vmem, size = 0x12000, scoped, tag = 'internal scratch']
  #allocation2 [shape = 'f32[8,32]{1,0:T(8,128)}', space=vmem, size = 0x1000, scoped, tag = 'scratch operand']
  #allocation3 [shape = 'f32[8,32]{1,0:T(8,128)}', space=vmem, size = 0x1000, scoped, tag = 'scratch operand']
  #allocation4 [shape = 'f32[64,128]{1,0:T(8,128)}', space=vmem, size = 0x8000, scoped, tag = 'scratch operand']
  #allocation5 [shape = 'f32[64,32]{1,0:T(8,128)}', space=vmem, size = 0x8000, scoped, tag = 'scratch operand']
  %s0 = inlined_call_operand.vmem [shape: s32[64,1], index: 0, kind: input, shape index: {}]
  %s1 = inlined_call_operand.vmem [shape: f32[16,128], index: 1, kind: input, shape index: {}]
  %s2 = inlined_call_operand.vmem [shape: f32[32,128], index: 2, kind: input, shape index: {}]
  %s3 = inlined_call_operand.hbm [shape: f32[16,128], index: 3, kind: output, shape index: {}]
  %s4 = sld [smem:[#allocation0]]
  $region26: #{tpu_custom_call.1} parent=0
    _
  %s6 = ssub.s32 1, %s4
  %s7 = scalar_select 0, %s6, %s4
  $region1: #{tpu_custom_call.1} parent=0
    #allocation6 [shape = 'u8[8192]{0}', space=vmem, size = 0x2000, scoped, tag = 'output window, operand 0, single buffered']
    #allocation7 [shape = 's32[1]{0}', space=sflag, size = 0x4, scoped, tag = 'scoped memory for tpu_custom_call.1']
    %8 = vsyncpa [#allocation7], 0
    // Predicated region
    $region2: #{tpu_custom_call.1} parent=1 // pred_check
      _
    $region3: #{tpu_custom_call.1} parent=1 // pred_check_branch
      %10 = sbr.rel (0) target = $region5
    $region4: #{tpu_custom_call.1} parent=1 // pred_region
      _
    $region5: #{tpu_custom_call.1} parent=1 // pred_fallthru
      _
    // Predicated region
    $region6: #{tpu_custom_call.1} parent=1 // pred_check
      _
    $region7: #{tpu_custom_call.1} parent=1 // pred_check_branch
      %12 = sbr.rel (0) target = $region9
    $region8: #{tpu_custom_call.1} parent=1 // pred_region
      _
    $region9: #{tpu_custom_call.1} parent=1 // pred_fallthru
      _
    // Predicated region
    $region10: #{tpu_custom_call.1} parent=1 // pred_check
      _
    $region11: #{tpu_custom_call.1} parent=1 // pred_check_branch
      %14 = sbr.rel (0) target = $region13
    $region12: #{tpu_custom_call.1} parent=1 // pred_region
      _
    $region13: #{tpu_custom_call.1} parent=1 // pred_fallthru
      _
    %p15 = scmp.eq.s32.totalorder 0, 0
    // Predicated region
    $region14: #{tpu_custom_call.1} parent=1 // pred_check
      %p16 = pneg %p15
    $region15: #{tpu_custom_call.1} parent=1 // pred_check_branch
      %18 = sbr.rel (%p16) target = $region17
    $region16: #{tpu_custom_call.1} parent=1 // pred_region
      %vm19 = vcmask 261120
      %20 = vst.msk [vmem:[#allocation2] sm:$0xff] %vm19, 0.0
      %21 = vst.msk [vmem:[#allocation3] sm:$0xff] %vm19, 0.0
    $region17: #{tpu_custom_call.1} parent=1 // pred_fallthru
      _
    %v22 = vld [vmem:[%s0] sm:$0xff]
    %v23 = vld [vmem:[%s0 + $0x8] sm:$0xff]
    %v24 = vld [vmem:[%s0 + $0x10] sm:$0xff]
    %v25 = vld [vmem:[%s0 + $0x18] sm:$0xff]
    %v26 = vld [vmem:[%s0 + $0x20] sm:$0xff]
    %v27 = vld [vmem:[%s0 + $0x28] sm:$0xff]
    %v28 = vld [vmem:[%s0 + $0x30] sm:$0xff]
    %v29 = vld [vmem:[%s0 + $0x38] sm:$0xff]
    %v30 = vld [vmem:[%s1] sm:$0xff]
    %v31 = vld [vmem:[%s1 + $0x8] sm:$0xff]
    %vm32 = vcmp.eq.s32.totalorder %v22, 0
    %vm33 = vcmp.eq.s32.totalorder %v23, 0
    %vm34 = vcmp.eq.s32.totalorder %v24, 0
    %vm35 = vcmp.eq.s32.totalorder %v25, 0
    %vm36 = vcmp.eq.s32.totalorder %v26, 0
    %vm37 = vcmp.eq.s32.totalorder %v27, 0
    %vm38 = vcmp.eq.s32.totalorder %v28, 0
    %vm39 = vcmp.eq.s32.totalorder %v29, 0
    %v40 = vsel %vm32, 1, 0
    %v41 = vsel %vm33, 1, 0
    %v42 = vsel %vm34, 1, 0
    %v43 = vsel %vm35, 1, 0
    %v44 = vsel %vm36, 1, 0
    %v45 = vsel %vm37, 1, 0
    %v46 = vsel %vm38, 1, 0
    %v47 = vsel %vm39, 1, 0
    %48 = vset.pattern.permute.xlu0 0
    %49 = vperm.xlu0 %48, %v40
    %v50 = vpop.permute.xlu0 %49
    %51 = vset.pattern.permute.xlu0 0
    %52 = vperm.xlu0 %51, %v41
    %v53 = vpop.permute.xlu0 %52
    %54 = vset.pattern.permute.xlu0 0
    %55 = vperm.xlu0 %54, %v42
    %v56 = vpop.permute.xlu0 %55
    %57 = vset.pattern.permute.xlu0 0
    %58 = vperm.xlu0 %57, %v43
    %v59 = vpop.permute.xlu0 %58
    %60 = vset.pattern.permute.xlu0 0
    %61 = vperm.xlu0 %60, %v44
    %v62 = vpop.permute.xlu0 %61
    %63 = vset.pattern.permute.xlu0 0
    %64 = vperm.xlu0 %63, %v45
    %v65 = vpop.permute.xlu0 %64
    %66 = vset.pattern.permute.xlu0 0
    %67 = vperm.xlu0 %66, %v46
    %v68 = vpop.permute.xlu0 %67
    %69 = vset.pattern.permute.xlu0 0
    %70 = vperm.xlu0 %69, %v47
    %v71 = vpop.permute.xlu0 %70
    %vm72 = vcmp.eq.s32.totalorder %v50, 1
    %vm73 = vcmp.eq.s32.totalorder %v53, 1
    %vm74 = vcmp.eq.s32.totalorder %v56, 1
    %vm75 = vcmp.eq.s32.totalorder %v59, 1
    %vm76 = vcmp.eq.s32.totalorder %v62, 1
    %vm77 = vcmp.eq.s32.totalorder %v65, 1
    %vm78 = vcmp.eq.s32.totalorder %v68, 1
    %vm79 = vcmp.eq.s32.totalorder %v71, 1
    %v80 = vlaneseq
    %v81 = vshrl.u32 %v80, 7
    %v82 = vsub.s32 0, %v81
    %v83 = vrot.slane %v30, %v82
    %v84 = vsel %vm72, %v83, 0.0
    %v85 = vsel %vm73, %v83, 0.0
    %v86 = vsel %vm74, %v83, 0.0
    %v87 = vsel %vm75, %v83, 0.0
    %v88 = vsel %vm76, %v83, 0.0
    %v89 = vsel %vm77, %v83, 0.0
    %v90 = vsel %vm78, %v83, 0.0
    %v91 = vsel %vm79, %v83, 0.0
    %v92 = vadd.f32 %v84, 0.0
    %v93 = vadd.f32 %v85, 0.0
    %v94 = vadd.f32 %v86, 0.0
    %v95 = vadd.f32 %v87, 0.0
    %v96 = vadd.f32 %v88, 0.0
    %v97 = vadd.f32 %v89, 0.0
    %v98 = vadd.f32 %v90, 0.0
    %v99 = vadd.f32 %v91, 0.0
    %vm100 = vcmp.eq.s32.totalorder %v22, 1
    %vm101 = vcmp.eq.s32.totalorder %v23, 1
    %vm102 = vcmp.eq.s32.totalorder %v24, 1
    %vm103 = vcmp.eq.s32.totalorder %v25, 1
    %vm104 = vcmp.eq.s32.totalorder %v26, 1
    %vm105 = vcmp.eq.s32.totalorder %v27, 1
    %vm106 = vcmp.eq.s32.totalorder %v28, 1
    %vm107 = vcmp.eq.s32.totalorder %v29, 1
    %v108 = vsel %vm100, 1, 0
    %v109 = vsel %vm101, 1, 0
    %v110 = vsel %vm102, 1, 0
    %v111 = vsel %vm103, 1, 0
    %v112 = vsel %vm104, 1, 0
    %v113 = vsel %vm105, 1, 0
    %v114 = vsel %vm106, 1, 0
    %v115 = vsel %vm107, 1, 0
    %116 = vset.pattern.permute.xlu0 0
    %117 = vperm.xlu0 %116, %v108
    %v118 = vpop.permute.xlu0 %117
    %119 = vset.pattern.permute.xlu0 0
    %120 = vperm.xlu0 %119, %v109
    %v121 = vpop.permute.xlu0 %120
    %122 = vset.pattern.permute.xlu0 0
    %123 = vperm.xlu0 %122, %v110
    %v124 = vpop.permute.xlu0 %123
    %125 = vset.pattern.permute.xlu0 0
    %126 = vperm.xlu0 %125, %v111
    %v127 = vpop.permute.xlu0 %126
    %128 = vset.pattern.permute.xlu0 0
    %129 = vperm.xlu0 %128, %v112
    %v130 = vpop.permute.xlu0 %129
    %131 = vset.pattern.permute.xlu0 0
    %132 = vperm.xlu0 %131, %v113
    %v133 = vpop.permute.xlu0 %132
    %134 = vset.pattern.permute.xlu0 0
    %135 = vperm.xlu0 %134, %v114
    %v136 = vpop.permute.xlu0 %135
    %137 = vset.pattern.permute.xlu0 0
    %138 = vperm.xlu0 %137, %v115
    %v139 = vpop.permute.xlu0 %138
    %vm140 = vcmp.eq.s32.totalorder %v118, 1
    %vm141 = vcmp.eq.s32.totalorder %v121, 1
    %vm142 = vcmp.eq.s32.totalorder %v124, 1
    %vm143 = vcmp.eq.s32.totalorder %v127, 1
    %vm144 = vcmp.eq.s32.totalorder %v130, 1
    %vm145 = vcmp.eq.s32.totalorder %v133, 1
    %vm146 = vcmp.eq.s32.totalorder %v136, 1
    %vm147 = vcmp.eq.s32.totalorder %v139, 1
    %v148 = vlaneseq
    %v149 = vshrl.u32 %v148, 7
    %v150 = vsub.s32 1, %v149
    %v151 = vrot.slane %v30, %v150
    %v152 = vsel %vm140, %v151, 0.0
    %v153 = vsel %vm141, %v151, 0.0
    %v154 = vsel %vm142, %v151, 0.0
    %v155 = vsel %vm143, %v151, 0.0
    %v156 = vsel %vm144, %v151, 0.0
    %v157 = vsel %vm145, %v151, 0.0
    %v158 = vsel %vm146, %v151, 0.0
    %v159 = vsel %vm147, %v151, 0.0
    %v160 = vadd.f32 %v92, %v152
    %v161 = vadd.f32 %v93, %v153
    %v162 = vadd.f32 %v94, %v154
    %v163 = vadd.f32 %v95, %v155
    %v164 = vadd.f32 %v96, %v156
    %v165 = vadd.f32 %v97, %v157
    %v166 = vadd.f32 %v98, %v158
    %v167 = vadd.f32 %v99, %v159
    %vm168 = vcmp.eq.s32.totalorder %v22, 2
    %vm169 = vcmp.eq.s32.totalorder %v23, 2
    %vm170 = vcmp.eq.s32.totalorder %v24, 2
    %vm171 = vcmp.eq.s32.totalorder %v25, 2
    %vm172 = vcmp.eq.s32.totalorder %v26, 2
    %vm173 = vcmp.eq.s32.totalorder %v27, 2
    %vm174 = vcmp.eq.s32.totalorder %v28, 2
    %vm175 = vcmp.eq.s32.totalorder %v29, 2
    %v176 = vsel %vm168, 1, 0
    %v177 = vsel %vm169, 1, 0
    %v178 = vsel %vm170, 1, 0
    %v179 = vsel %vm171, 1, 0
    %v180 = vsel %vm172, 1, 0
    %v181 = vsel %vm173, 1, 0
    %v182 = vsel %vm174, 1, 0
    %v183 = vsel %vm175, 1, 0
    %184 = vset.pattern.permute.xlu0 0
    %185 = vperm.xlu0 %184, %v176
    %v186 = vpop.permute.xlu0 %185
    %187 = vset.pattern.permute.xlu0 0
    %188 = vperm.xlu0 %187, %v177
    %v189 = vpop.permute.xlu0 %188
    %190 = vset.pattern.permute.xlu0 0
    %191 = vperm.xlu0 %190, %v178
    %v192 = vpop.permute.xlu0 %191
    %193 = vset.pattern.permute.xlu0 0
    %194 = vperm.xlu0 %193, %v179
    %v195 = vpop.permute.xlu0 %194
    %196 = vset.pattern.permute.xlu0 0
    %197 = vperm.xlu0 %196, %v180
    %v198 = vpop.permute.xlu0 %197
    %199 = vset.pattern.permute.xlu0 0
    %200 = vperm.xlu0 %199, %v181
    %v201 = vpop.permute.xlu0 %200
    %202 = vset.pattern.permute.xlu0 0
    %203 = vperm.xlu0 %202, %v182
    %v204 = vpop.permute.xlu0 %203
    %205 = vset.pattern.permute.xlu0 0
    %206 = vperm.xlu0 %205, %v183
    %v207 = vpop.permute.xlu0 %206
    %vm208 = vcmp.eq.s32.totalorder %v186, 1
    %vm209 = vcmp.eq.s32.totalorder %v189, 1
    %vm210 = vcmp.eq.s32.totalorder %v192, 1
    %vm211 = vcmp.eq.s32.totalorder %v195, 1
    %vm212 = vcmp.eq.s32.totalorder %v198, 1
    %vm213 = vcmp.eq.s32.totalorder %v201, 1
    %vm214 = vcmp.eq.s32.totalorder %v204, 1
    %vm215 = vcmp.eq.s32.totalorder %v207, 1
    %v216 = vlaneseq
    %v217 = vshrl.u32 %v216, 7
    %v218 = vsub.s32 2, %v217
    %v219 = vrot.slane %v30, %v218
    %v220 = vsel %vm208, %v219, 0.0
    %v221 = vsel %vm209, %v219, 0.0
    %v222 = vsel %vm210, %v219, 0.0
    %v223 = vsel %vm211, %v219, 0.0
    %v224 = vsel %vm212, %v219, 0.0
    %v225 = vsel %vm213, %v219, 0.0
    %v226 = vsel %vm214, %v219, 0.0
    %v227 = vsel %vm215, %v219, 0.0
    %v228 = vadd.f32 %v160, %v220
    %v229 = vadd.f32 %v161, %v221
    %v230 = vadd.f32 %v162, %v222
    %v231 = vadd.f32 %v163, %v223
    %v232 = vadd.f32 %v164, %v224
    %v233 = vadd.f32 %v165, %v225
    %v234 = vadd.f32 %v166, %v226
    %v235 = vadd.f32 %v167, %v227
    %vm236 = vcmp.eq.s32.totalorder %v22, 3
    %vm237 = vcmp.eq.s32.totalorder %v23, 3
    %vm238 = vcmp.eq.s32.totalorder %v24, 3
    %vm239 = vcmp.eq.s32.totalorder %v25, 3
    %vm240 = vcmp.eq.s32.totalorder %v26, 3
    %vm241 = vcmp.eq.s32.totalorder %v27, 3
    %vm242 = vcmp.eq.s32.totalorder %v28, 3
    %vm243 = vcmp.eq.s32.totalorder %v29, 3
    %v244 = vsel %vm236, 1, 0
    %v245 = vsel %vm237, 1, 0
    %v246 = vsel %vm238, 1, 0
    %v247 = vsel %vm239, 1, 0
    %v248 = vsel %vm240, 1, 0
    %v249 = vsel %vm241, 1, 0
    %v250 = vsel %vm242, 1, 0
    %v251 = vsel %vm243, 1, 0
    %252 = vset.pattern.permute.xlu0 0
    %253 = vperm.xlu0 %252, %v244
    %v254 = vpop.permute.xlu0 %253
    %255 = vset.pattern.permute.xlu0 0
    %256 = vperm.xlu0 %255, %v245
    %v257 = vpop.permute.xlu0 %256
    %258 = vset.pattern.permute.xlu0 0
    %259 = vperm.xlu0 %258, %v246
    %v260 = vpop.permute.xlu0 %259
    %261 = vset.pattern.permute.xlu0 0
    %262 = vperm.xlu0 %261, %v247
    %v263 = vpop.permute.xlu0 %262
    %264 = vset.pattern.permute.xlu0 0
    %265 = vperm.xlu0 %264, %v248
    %v266 = vpop.permute.xlu0 %265
    %267 = vset.pattern.permute.xlu0 0
    %268 = vperm.xlu0 %267, %v249
    %v269 = vpop.permute.xlu0 %268
    %270 = vset.pattern.permute.xlu0 0
    %271 = vperm.xlu0 %270, %v250
    %v272 = vpop.permute.xlu0 %271
    %273 = vset.pattern.permute.xlu0 0
    %274 = vperm.xlu0 %273, %v251
    %v275 = vpop.permute.xlu0 %274
    %vm276 = vcmp.eq.s32.totalorder %v254, 1
    %vm277 = vcmp.eq.s32.totalorder %v257, 1
    %vm278 = vcmp.eq.s32.totalorder %v260, 1
    %vm279 = vcmp.eq.s32.totalorder %v263, 1
    %vm280 = vcmp.eq.s32.totalorder %v266, 1
    %vm281 = vcmp.eq.s32.totalorder %v269, 1
    %vm282 = vcmp.eq.s32.totalorder %v272, 1
    %vm283 = vcmp.eq.s32.totalorder %v275, 1
    %v284 = vlaneseq
    %v285 = vshrl.u32 %v284, 7
    %v286 = vsub.s32 3, %v285
    %v287 = vrot.slane %v30, %v286
    %v288 = vsel %vm276, %v287, 0.0
    %v289 = vsel %vm277, %v287, 0.0
    %v290 = vsel %vm278, %v287, 0.0
    %v291 = vsel %vm279, %v287, 0.0
    %v292 = vsel %vm280, %v287, 0.0
    %v293 = vsel %vm281, %v287, 0.0
    %v294 = vsel %vm282, %v287, 0.0
    %v295 = vsel %vm283, %v287, 0.0
    %v296 = vadd.f32 %v228, %v288
    %v297 = vadd.f32 %v229, %v289
    %v298 = vadd.f32 %v230, %v290
    %v299 = vadd.f32 %v231, %v291
    %v300 = vadd.f32 %v232, %v292
    %v301 = vadd.f32 %v233, %v293
    %v302 = vadd.f32 %v234, %v294
    %v303 = vadd.f32 %v235, %v295
    %vm304 = vcmp.eq.s32.totalorder %v22, 4
    %vm305 = vcmp.eq.s32.totalorder %v23, 4
    %vm306 = vcmp.eq.s32.totalorder %v24, 4
    %vm307 = vcmp.eq.s32.totalorder %v25, 4
    %vm308 = vcmp.eq.s32.totalorder %v26, 4
    %vm309 = vcmp.eq.s32.totalorder %v27, 4
    %vm310 = vcmp.eq.s32.totalorder %v28, 4
    %vm311 = vcmp.eq.s32.totalorder %v29, 4
    %v312 = vsel %vm304, 1, 0
    %v313 = vsel %vm305, 1, 0
    %v314 = vsel %vm306, 1, 0
    %v315 = vsel %vm307, 1, 0
    %v316 = vsel %vm308, 1, 0
    %v317 = vsel %vm309, 1, 0
    %v318 = vsel %vm310, 1, 0
    %v319 = vsel %vm311, 1, 0
    %320 = vset.pattern.permute.xlu0 0
    %321 = vperm.xlu0 %320, %v312
    %v322 = vpop.permute.xlu0 %321
    %323 = vset.pattern.permute.xlu0 0
    %324 = vperm.xlu0 %323, %v313
    %v325 = vpop.permute.xlu0 %324
    %326 = vset.pattern.permute.xlu0 0
    %327 = vperm.xlu0 %326, %v314
    %v328 = vpop.permute.xlu0 %327
    %329 = vset.pattern.permute.xlu0 0
    %330 = vperm.xlu0 %329, %v315
    %v331 = vpop.permute.xlu0 %330
    %332 = vset.pattern.permute.xlu0 0
    %333 = vperm.xlu0 %332, %v316
    %v334 = vpop.permute.xlu0 %333
    %335 = vset.pattern.permute.xlu0 0
    %336 = vperm.xlu0 %335, %v317
    %v337 = vpop.permute.xlu0 %336
    %338 = vset.pattern.permute.xlu0 0
    %339 = vperm.xlu0 %338, %v318
    %v340 = vpop.permute.xlu0 %339
    %341 = vset.pattern.permute.xlu0 0
    %342 = vperm.xlu0 %341, %v319
    %v343 = vpop.permute.xlu0 %342
    %vm344 = vcmp.eq.s32.totalorder %v322, 1
    %vm345 = vcmp.eq.s32.totalorder %v325, 1
    %vm346 = vcmp.eq.s32.totalorder %v328, 1
    %vm347 = vcmp.eq.s32.totalorder %v331, 1
    %vm348 = vcmp.eq.s32.totalorder %v334, 1
    %vm349 = vcmp.eq.s32.totalorder %v337, 1
    %vm350 = vcmp.eq.s32.totalorder %v340, 1
    %vm351 = vcmp.eq.s32.totalorder %v343, 1
    %v352 = vlaneseq
    %v353 = vshrl.u32 %v352, 7
    %v354 = vsub.s32 4, %v353
    %v355 = vrot.slane %v30, %v354
    %v356 = vsel %vm344, %v355, 0.0
    %v357 = vsel %vm345, %v355, 0.0
    %v358 = vsel %vm346, %v355, 0.0
    %v359 = vsel %vm347, %v355, 0.0
    %v360 = vsel %vm348, %v355, 0.0
    %v361 = vsel %vm349, %v355, 0.0
    %v362 = vsel %vm350, %v355, 0.0
    %v363 = vsel %vm351, %v355, 0.0
    %v364 = vadd.f32 %v296, %v356
    %v365 = vadd.f32 %v297, %v357
    %v366 = vadd.f32 %v298, %v358
    %v367 = vadd.f32 %v299, %v359
    %v368 = vadd.f32 %v300, %v360
    %v369 = vadd.f32 %v301, %v361
    %v370 = vadd.f32 %v302, %v362
    %v371 = vadd.f32 %v303, %v363
    %vm372 = vcmp.eq.s32.totalorder %v22, 5
    %vm373 = vcmp.eq.s32.totalorder %v23, 5
    %vm374 = vcmp.eq.s32.totalorder %v24, 5
    %vm375 = vcmp.eq.s32.totalorder %v25, 5
    %vm376 = vcmp.eq.s32.totalorder %v26, 5
    %vm377 = vcmp.eq.s32.totalorder %v27, 5
    %vm378 = vcmp.eq.s32.totalorder %v28, 5
    %vm379 = vcmp.eq.s32.totalorder %v29, 5
    %v380 = vsel %vm372, 1, 0
    %v381 = vsel %vm373, 1, 0
    %v382 = vsel %vm374, 1, 0
    %v383 = vsel %vm375, 1, 0
    %v384 = vsel %vm376, 1, 0
    %v385 = vsel %vm377, 1, 0
    %v386 = vsel %vm378, 1, 0
    %v387 = vsel %vm379, 1, 0
    %388 = vset.pattern.permute.xlu0 0
    %389 = vperm.xlu0 %388, %v380
    %v390 = vpop.permute.xlu0 %389
    %391 = vset.pattern.permute.xlu0 0
    %392 = vperm.xlu0 %391, %v381
    %v393 = vpop.permute.xlu0 %392
    %394 = vset.pattern.permute.xlu0 0
    %395 = vperm.xlu0 %394, %v382
    %v396 = vpop.permute.xlu0 %395
    %397 = vset.pattern.permute.xlu0 0
    %398 = vperm.xlu0 %397, %v383
    %v399 = vpop.permute.xlu0 %398
    %400 = vset.pattern.permute.xlu0 0
    %401 = vperm.xlu0 %400, %v384
    %v402 = vpop.permute.xlu0 %401
    %403 = vset.pattern.permute.xlu0 0
    %404 = vperm.xlu0 %403, %v385
    %v405 = vpop.permute.xlu0 %404
    %406 = vset.pattern.permute.xlu0 0
    %407 = vperm.xlu0 %406, %v386
    %v408 = vpop.permute.xlu0 %407
    %409 = vset.pattern.permute.xlu0 0
    %410 = vperm.xlu0 %409, %v387
    %v411 = vpop.permute.xlu0 %410
    %vm412 = vcmp.eq.s32.totalorder %v390, 1
    %vm413 = vcmp.eq.s32.totalorder %v393, 1
    %vm414 = vcmp.eq.s32.totalorder %v396, 1
    %vm415 = vcmp.eq.s32.totalorder %v399, 1
    %vm416 = vcmp.eq.s32.totalorder %v402, 1
    %vm417 = vcmp.eq.s32.totalorder %v405, 1
    %vm418 = vcmp.eq.s32.totalorder %v408, 1
    %vm419 = vcmp.eq.s32.totalorder %v411, 1
    %v420 = vlaneseq
    %v421 = vshrl.u32 %v420, 7
    %v422 = vsub.s32 5, %v421
    %v423 = vrot.slane %v30, %v422
    %v424 = vsel %vm412, %v423, 0.0
    %v425 = vsel %vm413, %v423, 0.0
    %v426 = vsel %vm414, %v423, 0.0
    %v427 = vsel %vm415, %v423, 0.0
    %v428 = vsel %vm416, %v423, 0.0
    %v429 = vsel %vm417, %v423, 0.0
    %v430 = vsel %vm418, %v423, 0.0
    %v431 = vsel %vm419, %v423, 0.0
    %v432 = vadd.f32 %v364, %v424
    %v433 = vadd.f32 %v365, %v425
    %v434 = vadd.f32 %v366, %v426
    %v435 = vadd.f32 %v367, %v427
    %v436 = vadd.f32 %v368, %v428
    %v437 = vadd.f32 %v369, %v429
    %v438 = vadd.f32 %v370, %v430
    %v439 = vadd.f32 %v371, %v431
    %vm440 = vcmp.eq.s32.totalorder %v22, 6
    %vm441 = vcmp.eq.s32.totalorder %v23, 6
    %vm442 = vcmp.eq.s32.totalorder %v24, 6
    %vm443 = vcmp.eq.s32.totalorder %v25, 6
    %vm444 = vcmp.eq.s32.totalorder %v26, 6
    %vm445 = vcmp.eq.s32.totalorder %v27, 6
    %vm446 = vcmp.eq.s32.totalorder %v28, 6
    %vm447 = vcmp.eq.s32.totalorder %v29, 6
    %v448 = vsel %vm440, 1, 0
    %v449 = vsel %vm441, 1, 0
    %v450 = vsel %vm442, 1, 0
    %v451 = vsel %vm443, 1, 0
    %v452 = vsel %vm444, 1, 0
    %v453 = vsel %vm445, 1, 0
    %v454 = vsel %vm446, 1, 0
    %v455 = vsel %vm447, 1, 0
    %456 = vset.pattern.permute.xlu0 0
    %457 = vperm.xlu0 %456, %v448
    %v458 = vpop.permute.xlu0 %457
    %459 = vset.pattern.permute.xlu0 0
    %460 = vperm.xlu0 %459, %v449
    %v461 = vpop.permute.xlu0 %460
    %462 = vset.pattern.permute.xlu0 0
    %463 = vperm.xlu0 %462, %v450
    %v464 = vpop.permute.xlu0 %463
    %465 = vset.pattern.permute.xlu0 0
    %466 = vperm.xlu0 %465, %v451
    %v467 = vpop.permute.xlu0 %466
    %468 = vset.pattern.permute.xlu0 0
    %469 = vperm.xlu0 %468, %v452
    %v470 = vpop.permute.xlu0 %469
    %471 = vset.pattern.permute.xlu0 0
    %472 = vperm.xlu0 %471, %v453
    %v473 = vpop.permute.xlu0 %472
    %474 = vset.pattern.permute.xlu0 0
    %475 = vperm.xlu0 %474, %v454
    %v476 = vpop.permute.xlu0 %475
    %477 = vset.pattern.permute.xlu0 0
    %478 = vperm.xlu0 %477, %v455
    %v479 = vpop.permute.xlu0 %478
    %vm480 = vcmp.eq.s32.totalorder %v458, 1
    %vm481 = vcmp.eq.s32.totalorder %v461, 1
    %vm482 = vcmp.eq.s32.totalorder %v464, 1
    %vm483 = vcmp.eq.s32.totalorder %v467, 1
    %vm484 = vcmp.eq.s32.totalorder %v470, 1
    %vm485 = vcmp.eq.s32.totalorder %v473, 1
    %vm486 = vcmp.eq.s32.totalorder %v476, 1
    %vm487 = vcmp.eq.s32.totalorder %v479, 1
    %v488 = vlaneseq
    %v489 = vshrl.u32 %v488, 7
    %v490 = vsub.s32 6, %v489
    %v491 = vrot.slane %v30, %v490
    %v492 = vsel %vm480, %v491, 0.0
    %v493 = vsel %vm481, %v491, 0.0
    %v494 = vsel %vm482, %v491, 0.0
    %v495 = vsel %vm483, %v491, 0.0
    %v496 = vsel %vm484, %v491, 0.0
    %v497 = vsel %vm485, %v491, 0.0
    %v498 = vsel %vm486, %v491, 0.0
    %v499 = vsel %vm487, %v491, 0.0
    %v500 = vadd.f32 %v432, %v492
    %v501 = vadd.f32 %v433, %v493
    %v502 = vadd.f32 %v434, %v494
    %v503 = vadd.f32 %v435, %v495
    %v504 = vadd.f32 %v436, %v496
    %v505 = vadd.f32 %v437, %v497
    %v506 = vadd.f32 %v438, %v498
    %v507 = vadd.f32 %v439, %v499
    %vm508 = vcmp.eq.s32.totalorder %v22, 7
    %vm509 = vcmp.eq.s32.totalorder %v23, 7
    %vm510 = vcmp.eq.s32.totalorder %v24, 7
    %vm511 = vcmp.eq.s32.totalorder %v25, 7
    %vm512 = vcmp.eq.s32.totalorder %v26, 7
    %vm513 = vcmp.eq.s32.totalorder %v27, 7
    %vm514 = vcmp.eq.s32.totalorder %v28, 7
    %vm515 = vcmp.eq.s32.totalorder %v29, 7
    %v516 = vsel %vm508, 1, 0
    %v517 = vsel %vm509, 1, 0
    %v518 = vsel %vm510, 1, 0
    %v519 = vsel %vm511, 1, 0
    %v520 = vsel %vm512, 1, 0
    %v521 = vsel %vm513, 1, 0
    %v522 = vsel %vm514, 1, 0
    %v523 = vsel %vm515, 1, 0
    %524 = vset.pattern.permute.xlu0 0
    %525 = vperm.xlu0 %524, %v516
    %v526 = vpop.permute.xlu0 %525
    %527 = vset.pattern.permute.xlu0 0
    %528 = vperm.xlu0 %527, %v517
    %v529 = vpop.permute.xlu0 %528
    %530 = vset.pattern.permute.xlu0 0
    %531 = vperm.xlu0 %530, %v518
    %v532 = vpop.permute.xlu0 %531
    %533 = vset.pattern.permute.xlu0 0
    %534 = vperm.xlu0 %533, %v519
    %v535 = vpop.permute.xlu0 %534
    %536 = vset.pattern.permute.xlu0 0
    %537 = vperm.xlu0 %536, %v520
    %v538 = vpop.permute.xlu0 %537
    %539 = vset.pattern.permute.xlu0 0
    %540 = vperm.xlu0 %539, %v521
    %v541 = vpop.permute.xlu0 %540
    %542 = vset.pattern.permute.xlu0 0
    %543 = vperm.xlu0 %542, %v522
    %v544 = vpop.permute.xlu0 %543
    %545 = vset.pattern.permute.xlu0 0
    %546 = vperm.xlu0 %545, %v523
    %v547 = vpop.permute.xlu0 %546
    %vm548 = vcmp.eq.s32.totalorder %v526, 1
    %vm549 = vcmp.eq.s32.totalorder %v529, 1
    %vm550 = vcmp.eq.s32.totalorder %v532, 1
    %vm551 = vcmp.eq.s32.totalorder %v535, 1
    %vm552 = vcmp.eq.s32.totalorder %v538, 1
    %vm553 = vcmp.eq.s32.totalorder %v541, 1
    %vm554 = vcmp.eq.s32.totalorder %v544, 1
    %vm555 = vcmp.eq.s32.totalorder %v547, 1
    %v556 = vlaneseq
    %v557 = vshrl.u32 %v556, 7
    %v558 = vsub.s32 7, %v557
    %v559 = vrot.slane %v30, %v558
    %v560 = vsel %vm548, %v559, 0.0
    %v561 = vsel %vm549, %v559, 0.0
    %v562 = vsel %vm550, %v559, 0.0
    %v563 = vsel %vm551, %v559, 0.0
    %v564 = vsel %vm552, %v559, 0.0
    %v565 = vsel %vm553, %v559, 0.0
    %v566 = vsel %vm554, %v559, 0.0
    %v567 = vsel %vm555, %v559, 0.0
    %v568 = vadd.f32 %v500, %v560
    %v569 = vadd.f32 %v501, %v561
    %v570 = vadd.f32 %v502, %v562
    %v571 = vadd.f32 %v503, %v563
    %v572 = vadd.f32 %v504, %v564
    %v573 = vadd.f32 %v505, %v565
    %v574 = vadd.f32 %v506, %v566
    %v575 = vadd.f32 %v507, %v567
    %vm576 = vcmp.eq.s32.totalorder %v22, 8
    %vm577 = vcmp.eq.s32.totalorder %v23, 8
    %vm578 = vcmp.eq.s32.totalorder %v24, 8
    %vm579 = vcmp.eq.s32.totalorder %v25, 8
    %vm580 = vcmp.eq.s32.totalorder %v26, 8
    %vm581 = vcmp.eq.s32.totalorder %v27, 8
    %vm582 = vcmp.eq.s32.totalorder %v28, 8
    %vm583 = vcmp.eq.s32.totalorder %v29, 8
    %v584 = vsel %vm576, 1, 0
    %v585 = vsel %vm577, 1, 0
    %v586 = vsel %vm578, 1, 0
    %v587 = vsel %vm579, 1, 0
    %v588 = vsel %vm580, 1, 0
    %v589 = vsel %vm581, 1, 0
    %v590 = vsel %vm582, 1, 0
    %v591 = vsel %vm583, 1, 0
    %592 = vset.pattern.permute.xlu0 0
    %593 = vperm.xlu0 %592, %v584
    %v594 = vpop.permute.xlu0 %593
    %595 = vset.pattern.permute.xlu0 0
    %596 = vperm.xlu0 %595, %v585
    %v597 = vpop.permute.xlu0 %596
    %598 = vset.pattern.permute.xlu0 0
    %599 = vperm.xlu0 %598, %v586
    %v600 = vpop.permute.xlu0 %599
    %601 = vset.pattern.permute.xlu0 0
    %602 = vperm.xlu0 %601, %v587
    %v603 = vpop.permute.xlu0 %602
    %604 = vset.pattern.permute.xlu0 0
    %605 = vperm.xlu0 %604, %v588
    %v606 = vpop.permute.xlu0 %605
    %607 = vset.pattern.permute.xlu0 0
    %608 = vperm.xlu0 %607, %v589
    %v609 = vpop.permute.xlu0 %608
    %610 = vset.pattern.permute.xlu0 0
    %611 = vperm.xlu0 %610, %v590
    %v612 = vpop.permute.xlu0 %611
    %613 = vset.pattern.permute.xlu0 0
    %614 = vperm.xlu0 %613, %v591
    %v615 = vpop.permute.xlu0 %614
    %vm616 = vcmp.eq.s32.totalorder %v594, 1
    %vm617 = vcmp.eq.s32.totalorder %v597, 1
    %vm618 = vcmp.eq.s32.totalorder %v600, 1
    %vm619 = vcmp.eq.s32.totalorder %v603, 1
    %vm620 = vcmp.eq.s32.totalorder %v606, 1
    %vm621 = vcmp.eq.s32.totalorder %v609, 1
    %vm622 = vcmp.eq.s32.totalorder %v612, 1
    %vm623 = vcmp.eq.s32.totalorder %v615, 1
    %v624 = vlaneseq
    %v625 = vshrl.u32 %v624, 7
    %v626 = vsub.s32 0, %v625
    %v627 = vrot.slane %v31, %v626
    %v628 = vsel %vm616, %v627, 0.0
    %v629 = vsel %vm617, %v627, 0.0
    %v630 = vsel %vm618, %v627, 0.0
    %v631 = vsel %vm619, %v627, 0.0
    %v632 = vsel %vm620, %v627, 0.0
    %v633 = vsel %vm621, %v627, 0.0
    %v634 = vsel %vm622, %v627, 0.0
    %v635 = vsel %vm623, %v627, 0.0
    %v636 = vadd.f32 %v568, %v628
    %v637 = vadd.f32 %v569, %v629
    %v638 = vadd.f32 %v570, %v630
    %v639 = vadd.f32 %v571, %v631
    %v640 = vadd.f32 %v572, %v632
    %v641 = vadd.f32 %v573, %v633
    %v642 = vadd.f32 %v574, %v634
    %v643 = vadd.f32 %v575, %v635
    %vm644 = vcmp.eq.s32.totalorder %v22, 9
    %vm645 = vcmp.eq.s32.totalorder %v23, 9
    %vm646 = vcmp.eq.s32.totalorder %v24, 9
    %vm647 = vcmp.eq.s32.totalorder %v25, 9
    %vm648 = vcmp.eq.s32.totalorder %v26, 9
    %vm649 = vcmp.eq.s32.totalorder %v27, 9
    %vm650 = vcmp.eq.s32.totalorder %v28, 9
    %vm651 = vcmp.eq.s32.totalorder %v29, 9
    %v652 = vsel %vm644, 1, 0
    %v653 = vsel %vm645, 1, 0
    %v654 = vsel %vm646, 1, 0
    %v655 = vsel %vm647, 1, 0
    %v656 = vsel %vm648, 1, 0
    %v657 = vsel %vm649, 1, 0
    %v658 = vsel %vm650, 1, 0
    %v659 = vsel %vm651, 1, 0
    %660 = vset.pattern.permute.xlu0 0
    %661 = vperm.xlu0 %660, %v652
    %v662 = vpop.permute.xlu0 %661
    %663 = vset.pattern.permute.xlu0 0
    %664 = vperm.xlu0 %663, %v653
    %v665 = vpop.permute.xlu0 %664
    %666 = vset.pattern.permute.xlu0 0
    %667 = vperm.xlu0 %666, %v654
    %v668 = vpop.permute.xlu0 %667
    %669 = vset.pattern.permute.xlu0 0
    %670 = vperm.xlu0 %669, %v655
    %v671 = vpop.permute.xlu0 %670
    %672 = vset.pattern.permute.xlu0 0
    %673 = vperm.xlu0 %672, %v656
    %v674 = vpop.permute.xlu0 %673
    %675 = vset.pattern.permute.xlu0 0
    %676 = vperm.xlu0 %675, %v657
    %v677 = vpop.permute.xlu0 %676
    %678 = vset.pattern.permute.xlu0 0
    %679 = vperm.xlu0 %678, %v658
    %v680 = vpop.permute.xlu0 %679
    %681 = vset.pattern.permute.xlu0 0
    %682 = vperm.xlu0 %681, %v659
    %v683 = vpop.permute.xlu0 %682
    %vm684 = vcmp.eq.s32.totalorder %v662, 1
    %vm685 = vcmp.eq.s32.totalorder %v665, 1
    %vm686 = vcmp.eq.s32.totalorder %v668, 1
    %vm687 = vcmp.eq.s32.totalorder %v671, 1
    %vm688 = vcmp.eq.s32.totalorder %v674, 1
    %vm689 = vcmp.eq.s32.totalorder %v677, 1
    %vm690 = vcmp.eq.s32.totalorder %v680, 1
    %vm691 = vcmp.eq.s32.totalorder %v683, 1
    %v692 = vlaneseq
    %v693 = vshrl.u32 %v692, 7
    %v694 = vsub.s32 1, %v693
    %v695 = vrot.slane %v31, %v694
    %v696 = vsel %vm684, %v695, 0.0
    %v697 = vsel %vm685, %v695, 0.0
    %v698 = vsel %vm686, %v695, 0.0
    %v699 = vsel %vm687, %v695, 0.0
    %v700 = vsel %vm688, %v695, 0.0
    %v701 = vsel %vm689, %v695, 0.0
    %v702 = vsel %vm690, %v695, 0.0
    %v703 = vsel %vm691, %v695, 0.0
    %v704 = vadd.f32 %v636, %v696
    %v705 = vadd.f32 %v637, %v697
    %v706 = vadd.f32 %v638, %v698
    %v707 = vadd.f32 %v639, %v699
    %v708 = vadd.f32 %v640, %v700
    %v709 = vadd.f32 %v641, %v701
    %v710 = vadd.f32 %v642, %v702
    %v711 = vadd.f32 %v643, %v703
    %vm712 = vcmp.eq.s32.totalorder %v22, 10
    %vm713 = vcmp.eq.s32.totalorder %v23, 10
    %vm714 = vcmp.eq.s32.totalorder %v24, 10
    %vm715 = vcmp.eq.s32.totalorder %v25, 10
    %vm716 = vcmp.eq.s32.totalorder %v26, 10
    %vm717 = vcmp.eq.s32.totalorder %v27, 10
    %vm718 = vcmp.eq.s32.totalorder %v28, 10
    %vm719 = vcmp.eq.s32.totalorder %v29, 10
    %v720 = vsel %vm712, 1, 0
    %v721 = vsel %vm713, 1, 0
    %v722 = vsel %vm714, 1, 0
    %v723 = vsel %vm715, 1, 0
    %v724 = vsel %vm716, 1, 0
    %v725 = vsel %vm717, 1, 0
    %v726 = vsel %vm718, 1, 0
    %v727 = vsel %vm719, 1, 0
    %728 = vset.pattern.permute.xlu0 0
    %729 = vperm.xlu0 %728, %v720
    %v730 = vpop.permute.xlu0 %729
    %731 = vset.pattern.permute.xlu0 0
    %732 = vperm.xlu0 %731, %v721
    %v733 = vpop.permute.xlu0 %732
    %734 = vset.pattern.permute.xlu0 0
    %735 = vperm.xlu0 %734, %v722
    %v736 = vpop.permute.xlu0 %735
    %737 = vset.pattern.permute.xlu0 0
    %738 = vperm.xlu0 %737, %v723
    %v739 = vpop.permute.xlu0 %738
    %740 = vset.pattern.permute.xlu0 0
    %741 = vperm.xlu0 %740, %v724
    %v742 = vpop.permute.xlu0 %741
    %743 = vset.pattern.permute.xlu0 0
    %744 = vperm.xlu0 %743, %v725
    %v745 = vpop.permute.xlu0 %744
    %746 = vset.pattern.permute.xlu0 0
    %747 = vperm.xlu0 %746, %v726
    %v748 = vpop.permute.xlu0 %747
    %749 = vset.pattern.permute.xlu0 0
    %750 = vperm.xlu0 %749, %v727
    %v751 = vpop.permute.xlu0 %750
    %vm752 = vcmp.eq.s32.totalorder %v730, 1
    %vm753 = vcmp.eq.s32.totalorder %v733, 1
    %vm754 = vcmp.eq.s32.totalorder %v736, 1
    %vm755 = vcmp.eq.s32.totalorder %v739, 1
    %vm756 = vcmp.eq.s32.totalorder %v742, 1
    %vm757 = vcmp.eq.s32.totalorder %v745, 1
    %vm758 = vcmp.eq.s32.totalorder %v748, 1
    %vm759 = vcmp.eq.s32.totalorder %v751, 1
    %v760 = vlaneseq
    %v761 = vshrl.u32 %v760, 7
    %v762 = vsub.s32 2, %v761
    %v763 = vrot.slane %v31, %v762
    %v764 = vsel %vm752, %v763, 0.0
    %v765 = vsel %vm753, %v763, 0.0
    %v766 = vsel %vm754, %v763, 0.0
    %v767 = vsel %vm755, %v763, 0.0
    %v768 = vsel %vm756, %v763, 0.0
    %v769 = vsel %vm757, %v763, 0.0
    %v770 = vsel %vm758, %v763, 0.0
    %v771 = vsel %vm759, %v763, 0.0
    %v772 = vadd.f32 %v704, %v764
    %v773 = vadd.f32 %v705, %v765
    %v774 = vadd.f32 %v706, %v766
    %v775 = vadd.f32 %v707, %v767
    %v776 = vadd.f32 %v708, %v768
    %v777 = vadd.f32 %v709, %v769
    %v778 = vadd.f32 %v710, %v770
    %v779 = vadd.f32 %v711, %v771
    %vm780 = vcmp.eq.s32.totalorder %v22, 11
    %vm781 = vcmp.eq.s32.totalorder %v23, 11
    %vm782 = vcmp.eq.s32.totalorder %v24, 11
    %vm783 = vcmp.eq.s32.totalorder %v25, 11
    %vm784 = vcmp.eq.s32.totalorder %v26, 11
    %vm785 = vcmp.eq.s32.totalorder %v27, 11
    %vm786 = vcmp.eq.s32.totalorder %v28, 11
    %vm787 = vcmp.eq.s32.totalorder %v29, 11
    %v788 = vsel %vm780, 1, 0
    %v789 = vsel %vm781, 1, 0
    %v790 = vsel %vm782, 1, 0
    %v791 = vsel %vm783, 1, 0
    %v792 = vsel %vm784, 1, 0
    %v793 = vsel %vm785, 1, 0
    %v794 = vsel %vm786, 1, 0
    %v795 = vsel %vm787, 1, 0
    %796 = vset.pattern.permute.xlu0 0
    %797 = vperm.xlu0 %796, %v788
    %v798 = vpop.permute.xlu0 %797
    %799 = vset.pattern.permute.xlu0 0
    %800 = vperm.xlu0 %799, %v789
    %v801 = vpop.permute.xlu0 %800
    %802 = vset.pattern.permute.xlu0 0
    %803 = vperm.xlu0 %802, %v790
    %v804 = vpop.permute.xlu0 %803
    %805 = vset.pattern.permute.xlu0 0
    %806 = vperm.xlu0 %805, %v791
    %v807 = vpop.permute.xlu0 %806
    %808 = vset.pattern.permute.xlu0 0
    %809 = vperm.xlu0 %808, %v792
    %v810 = vpop.permute.xlu0 %809
    %811 = vset.pattern.permute.xlu0 0
    %812 = vperm.xlu0 %811, %v793
    %v813 = vpop.permute.xlu0 %812
    %814 = vset.pattern.permute.xlu0 0
    %815 = vperm.xlu0 %814, %v794
    %v816 = vpop.permute.xlu0 %815
    %817 = vset.pattern.permute.xlu0 0
    %818 = vperm.xlu0 %817, %v795
    %v819 = vpop.permute.xlu0 %818
    %vm820 = vcmp.eq.s32.totalorder %v798, 1
    %vm821 = vcmp.eq.s32.totalorder %v801, 1
    %vm822 = vcmp.eq.s32.totalorder %v804, 1
    %vm823 = vcmp.eq.s32.totalorder %v807, 1
    %vm824 = vcmp.eq.s32.totalorder %v810, 1
    %vm825 = vcmp.eq.s32.totalorder %v813, 1
    %vm826 = vcmp.eq.s32.totalorder %v816, 1
    %vm827 = vcmp.eq.s32.totalorder %v819, 1
    %v828 = vlaneseq
    %v829 = vshrl.u32 %v828, 7
    %v830 = vsub.s32 3, %v829
    %v831 = vrot.slane %v31, %v830
    %v832 = vsel %vm820, %v831, 0.0
    %v833 = vsel %vm821, %v831, 0.0
    %v834 = vsel %vm822, %v831, 0.0
    %v835 = vsel %vm823, %v831, 0.0
    %v836 = vsel %vm824, %v831, 0.0
    %v837 = vsel %vm825, %v831, 0.0
    %v838 = vsel %vm826, %v831, 0.0
    %v839 = vsel %vm827, %v831, 0.0
    %v840 = vadd.f32 %v772, %v832
    %v841 = vadd.f32 %v773, %v833
    %v842 = vadd.f32 %v774, %v834
    %v843 = vadd.f32 %v775, %v835
    %v844 = vadd.f32 %v776, %v836
    %v845 = vadd.f32 %v777, %v837
    %v846 = vadd.f32 %v778, %v838
    %v847 = vadd.f32 %v779, %v839
    %vm848 = vcmp.eq.s32.totalorder %v22, 12
    %vm849 = vcmp.eq.s32.totalorder %v23, 12
    %vm850 = vcmp.eq.s32.totalorder %v24, 12
    %vm851 = vcmp.eq.s32.totalorder %v25, 12
    %vm852 = vcmp.eq.s32.totalorder %v26, 12
    %vm853 = vcmp.eq.s32.totalorder %v27, 12
    %vm854 = vcmp.eq.s32.totalorder %v28, 12
    %vm855 = vcmp.eq.s32.totalorder %v29, 12
    %v856 = vsel %vm848, 1, 0
    %v857 = vsel %vm849, 1, 0
    %v858 = vsel %vm850, 1, 0
    %v859 = vsel %vm851, 1, 0
    %v860 = vsel %vm852, 1, 0
    %v861 = vsel %vm853, 1, 0
    %v862 = vsel %vm854, 1, 0
    %v863 = vsel %vm855, 1, 0
    %864 = vset.pattern.permute.xlu0 0
    %865 = vperm.xlu0 %864, %v856
    %v866 = vpop.permute.xlu0 %865
    %867 = vset.pattern.permute.xlu0 0
    %868 = vperm.xlu0 %867, %v857
    %v869 = vpop.permute.xlu0 %868
    %870 = vset.pattern.permute.xlu0 0
    %871 = vperm.xlu0 %870, %v858
    %v872 = vpop.permute.xlu0 %871
    %873 = vset.pattern.permute.xlu0 0
    %874 = vperm.xlu0 %873, %v859
    %v875 = vpop.permute.xlu0 %874
    %876 = vset.pattern.permute.xlu0 0
    %877 = vperm.xlu0 %876, %v860
    %v878 = vpop.permute.xlu0 %877
    %879 = vset.pattern.permute.xlu0 0
    %880 = vperm.xlu0 %879, %v861
    %v881 = vpop.permute.xlu0 %880
    %882 = vset.pattern.permute.xlu0 0
    %883 = vperm.xlu0 %882, %v862
    %v884 = vpop.permute.xlu0 %883
    %885 = vset.pattern.permute.xlu0 0
    %886 = vperm.xlu0 %885, %v863
    %v887 = vpop.permute.xlu0 %886
    %vm888 = vcmp.eq.s32.totalorder %v866, 1
    %vm889 = vcmp.eq.s32.totalorder %v869, 1
    %vm890 = vcmp.eq.s32.totalorder %v872, 1
    %vm891 = vcmp.eq.s32.totalorder %v875, 1
    %vm892 = vcmp.eq.s32.totalorder %v878, 1
    %vm893 = vcmp.eq.s32.totalorder %v881, 1
    %vm894 = vcmp.eq.s32.totalorder %v884, 1
    %vm895 = vcmp.eq.s32.totalorder %v887, 1
    %v896 = vlaneseq
    %v897 = vshrl.u32 %v896, 7
    %v898 = vsub.s32 4, %v897
    %v899 = vrot.slane %v31, %v898
    %v900 = vsel %vm888, %v899, 0.0
    %v901 = vsel %vm889, %v899, 0.0
    %v902 = vsel %vm890, %v899, 0.0
    %v903 = vsel %vm891, %v899, 0.0
    %v904 = vsel %vm892, %v899, 0.0
    %v905 = vsel %vm893, %v899, 0.0
    %v906 = vsel %vm894, %v899, 0.0
    %v907 = vsel %vm895, %v899, 0.0
    %v908 = vadd.f32 %v840, %v900
    %v909 = vadd.f32 %v841, %v901
    %v910 = vadd.f32 %v842, %v902
    %v911 = vadd.f32 %v843, %v903
    %v912 = vadd.f32 %v844, %v904
    %v913 = vadd.f32 %v845, %v905
    %v914 = vadd.f32 %v846, %v906
    %v915 = vadd.f32 %v847, %v907
    %vm916 = vcmp.eq.s32.totalorder %v22, 13
    %vm917 = vcmp.eq.s32.totalorder %v23, 13
    %vm918 = vcmp.eq.s32.totalorder %v24, 13
    %vm919 = vcmp.eq.s32.totalorder %v25, 13
    %vm920 = vcmp.eq.s32.totalorder %v26, 13
    %vm921 = vcmp.eq.s32.totalorder %v27, 13
    %vm922 = vcmp.eq.s32.totalorder %v28, 13
    %vm923 = vcmp.eq.s32.totalorder %v29, 13
    %v924 = vsel %vm916, 1, 0
    %v925 = vsel %vm917, 1, 0
    %v926 = vsel %vm918, 1, 0
    %v927 = vsel %vm919, 1, 0
    %v928 = vsel %vm920, 1, 0
    %v929 = vsel %vm921, 1, 0
    %v930 = vsel %vm922, 1, 0
    %v931 = vsel %vm923, 1, 0
    %932 = vset.pattern.permute.xlu0 0
    %933 = vperm.xlu0 %932, %v924
    %v934 = vpop.permute.xlu0 %933
    %935 = vset.pattern.permute.xlu0 0
    %936 = vperm.xlu0 %935, %v925
    %v937 = vpop.permute.xlu0 %936
    %938 = vset.pattern.permute.xlu0 0
    %939 = vperm.xlu0 %938, %v926
    %v940 = vpop.permute.xlu0 %939
    %941 = vset.pattern.permute.xlu0 0
    %942 = vperm.xlu0 %941, %v927
    %v943 = vpop.permute.xlu0 %942
    %944 = vset.pattern.permute.xlu0 0
    %945 = vperm.xlu0 %944, %v928
    %v946 = vpop.permute.xlu0 %945
    %947 = vset.pattern.permute.xlu0 0
    %948 = vperm.xlu0 %947, %v929
    %v949 = vpop.permute.xlu0 %948
    %950 = vset.pattern.permute.xlu0 0
    %951 = vperm.xlu0 %950, %v930
    %v952 = vpop.permute.xlu0 %951
    %953 = vset.pattern.permute.xlu0 0
    %954 = vperm.xlu0 %953, %v931
    %v955 = vpop.permute.xlu0 %954
    %vm956 = vcmp.eq.s32.totalorder %v934, 1
    %vm957 = vcmp.eq.s32.totalorder %v937, 1
    %vm958 = vcmp.eq.s32.totalorder %v940, 1
    %vm959 = vcmp.eq.s32.totalorder %v943, 1
    %vm960 = vcmp.eq.s32.totalorder %v946, 1
    %vm961 = vcmp.eq.s32.totalorder %v949, 1
    %vm962 = vcmp.eq.s32.totalorder %v952, 1
    %vm963 = vcmp.eq.s32.totalorder %v955, 1
    %v964 = vlaneseq
    %v965 = vshrl.u32 %v964, 7
    %v966 = vsub.s32 5, %v965
    %v967 = vrot.slane %v31, %v966
    %v968 = vsel %vm956, %v967, 0.0
    %v969 = vsel %vm957, %v967, 0.0
    %v970 = vsel %vm958, %v967, 0.0
    %v971 = vsel %vm959, %v967, 0.0
    %v972 = vsel %vm960, %v967, 0.0
    %v973 = vsel %vm961, %v967, 0.0
    %v974 = vsel %vm962, %v967, 0.0
    %v975 = vsel %vm963, %v967, 0.0
    %v976 = vadd.f32 %v908, %v968
    %v977 = vadd.f32 %v909, %v969
    %v978 = vadd.f32 %v910, %v970
    %v979 = vadd.f32 %v911, %v971
    %v980 = vadd.f32 %v912, %v972
    %v981 = vadd.f32 %v913, %v973
    %v982 = vadd.f32 %v914, %v974
    %v983 = vadd.f32 %v915, %v975
    %vm984 = vcmp.eq.s32.totalorder %v22, 14
    %vm985 = vcmp.eq.s32.totalorder %v23, 14
    %vm986 = vcmp.eq.s32.totalorder %v24, 14
    %vm987 = vcmp.eq.s32.totalorder %v25, 14
    %vm988 = vcmp.eq.s32.totalorder %v26, 14
    %vm989 = vcmp.eq.s32.totalorder %v27, 14
    %vm990 = vcmp.eq.s32.totalorder %v28, 14
    %vm991 = vcmp.eq.s32.totalorder %v29, 14
    %v992 = vsel %vm984, 1, 0
    %v993 = vsel %vm985, 1, 0
    %v994 = vsel %vm986, 1, 0
    %v995 = vsel %vm987, 1, 0
    %v996 = vsel %vm988, 1, 0
    %v997 = vsel %vm989, 1, 0
    %v998 = vsel %vm990, 1, 0
    %v999 = vsel %vm991, 1, 0
    %1000 = vset.pattern.permute.xlu0 0
    %1001 = vperm.xlu0 %1000, %v992
    %v1002 = vpop.permute.xlu0 %1001
    %1003 = vset.pattern.permute.xlu0 0
    %1004 = vperm.xlu0 %1003, %v993
    %v1005 = vpop.permute.xlu0 %1004
    %1006 = vset.pattern.permute.xlu0 0
    %1007 = vperm.xlu0 %1006, %v994
    %v1008 = vpop.permute.xlu0 %1007
    %1009 = vset.pattern.permute.xlu0 0
    %1010 = vperm.xlu0 %1009, %v995
    %v1011 = vpop.permute.xlu0 %1010
    %1012 = vset.pattern.permute.xlu0 0
    %1013 = vperm.xlu0 %1012, %v996
    %v1014 = vpop.permute.xlu0 %1013
    %1015 = vset.pattern.permute.xlu0 0
    %1016 = vperm.xlu0 %1015, %v997
    %v1017 = vpop.permute.xlu0 %1016
    %1018 = vset.pattern.permute.xlu0 0
    %1019 = vperm.xlu0 %1018, %v998
    %v1020 = vpop.permute.xlu0 %1019
    %1021 = vset.pattern.permute.xlu0 0
    %1022 = vperm.xlu0 %1021, %v999
    %v1023 = vpop.permute.xlu0 %1022
    %vm1024 = vcmp.eq.s32.totalorder %v1002, 1
    %vm1025 = vcmp.eq.s32.totalorder %v1005, 1
    %vm1026 = vcmp.eq.s32.totalorder %v1008, 1
    %vm1027 = vcmp.eq.s32.totalorder %v1011, 1
    %vm1028 = vcmp.eq.s32.totalorder %v1014, 1
    %vm1029 = vcmp.eq.s32.totalorder %v1017, 1
    %vm1030 = vcmp.eq.s32.totalorder %v1020, 1
    %vm1031 = vcmp.eq.s32.totalorder %v1023, 1
    %v1032 = vlaneseq
    %v1033 = vshrl.u32 %v1032, 7
    %v1034 = vsub.s32 6, %v1033
    %v1035 = vrot.slane %v31, %v1034
    %v1036 = vsel %vm1024, %v1035, 0.0
    %v1037 = vsel %vm1025, %v1035, 0.0
    %v1038 = vsel %vm1026, %v1035, 0.0
    %v1039 = vsel %vm1027, %v1035, 0.0
    %v1040 = vsel %vm1028, %v1035, 0.0
    %v1041 = vsel %vm1029, %v1035, 0.0
    %v1042 = vsel %vm1030, %v1035, 0.0
    %v1043 = vsel %vm1031, %v1035, 0.0
    %v1044 = vadd.f32 %v976, %v1036
    %v1045 = vadd.f32 %v977, %v1037
    %v1046 = vadd.f32 %v978, %v1038
    %v1047 = vadd.f32 %v979, %v1039
    %v1048 = vadd.f32 %v980, %v1040
    %v1049 = vadd.f32 %v981, %v1041
    %v1050 = vadd.f32 %v982, %v1042
    %v1051 = vadd.f32 %v983, %v1043
    %vm1052 = vcmp.eq.s32.totalorder %v22, 15
    %vm1053 = vcmp.eq.s32.totalorder %v23, 15
    %vm1054 = vcmp.eq.s32.totalorder %v24, 15
    %vm1055 = vcmp.eq.s32.totalorder %v25, 15
    %vm1056 = vcmp.eq.s32.totalorder %v26, 15
    %vm1057 = vcmp.eq.s32.totalorder %v27, 15
    %vm1058 = vcmp.eq.s32.totalorder %v28, 15
    %vm1059 = vcmp.eq.s32.totalorder %v29, 15
    %v1060 = vsel %vm1052, 1, 0
    %v1061 = vsel %vm1053, 1, 0
    %v1062 = vsel %vm1054, 1, 0
    %v1063 = vsel %vm1055, 1, 0
    %v1064 = vsel %vm1056, 1, 0
    %v1065 = vsel %vm1057, 1, 0
    %v1066 = vsel %vm1058, 1, 0
    %v1067 = vsel %vm1059, 1, 0
    %1068 = vset.pattern.permute.xlu0 0
    %1069 = vperm.xlu0 %1068, %v1060
    %v1070 = vpop.permute.xlu0 %1069
    %1071 = vset.pattern.permute.xlu0 0
    %1072 = vperm.xlu0 %1071, %v1061
    %v1073 = vpop.permute.xlu0 %1072
    %1074 = vset.pattern.permute.xlu0 0
    %1075 = vperm.xlu0 %1074, %v1062
    %v1076 = vpop.permute.xlu0 %1075
    %1077 = vset.pattern.permute.xlu0 0
    %1078 = vperm.xlu0 %1077, %v1063
    %v1079 = vpop.permute.xlu0 %1078
    %1080 = vset.pattern.permute.xlu0 0
    %1081 = vperm.xlu0 %1080, %v1064
    %v1082 = vpop.permute.xlu0 %1081
    %1083 = vset.pattern.permute.xlu0 0
    %1084 = vperm.xlu0 %1083, %v1065
    %v1085 = vpop.permute.xlu0 %1084
    %1086 = vset.pattern.permute.xlu0 0
    %1087 = vperm.xlu0 %1086, %v1066
    %v1088 = vpop.permute.xlu0 %1087
    %1089 = vset.pattern.permute.xlu0 0
    %1090 = vperm.xlu0 %1089, %v1067
    %v1091 = vpop.permute.xlu0 %1090
    %vm1092 = vcmp.eq.s32.totalorder %v1070, 1
    %vm1093 = vcmp.eq.s32.totalorder %v1073, 1
    %vm1094 = vcmp.eq.s32.totalorder %v1076, 1
    %vm1095 = vcmp.eq.s32.totalorder %v1079, 1
    %vm1096 = vcmp.eq.s32.totalorder %v1082, 1
    %vm1097 = vcmp.eq.s32.totalorder %v1085, 1
    %vm1098 = vcmp.eq.s32.totalorder %v1088, 1
    %vm1099 = vcmp.eq.s32.totalorder %v1091, 1
    %v1100 = vlaneseq
    %v1101 = vshrl.u32 %v1100, 7
    %v1102 = vsub.s32 7, %v1101
    %v1103 = vrot.slane %v31, %v1102
    %v1104 = vsel %vm1092, %v1103, 0.0
    %v1105 = vsel %vm1093, %v1103, 0.0
    %v1106 = vsel %vm1094, %v1103, 0.0
    %v1107 = vsel %vm1095, %v1103, 0.0
    %v1108 = vsel %vm1096, %v1103, 0.0
    %v1109 = vsel %vm1097, %v1103, 0.0
    %v1110 = vsel %vm1098, %v1103, 0.0
    %v1111 = vsel %vm1099, %v1103, 0.0
    %v1112 = vadd.f32 %v1044, %v1104
    %v1113 = vadd.f32 %v1045, %v1105
    %v1114 = vadd.f32 %v1046, %v1106
    %v1115 = vadd.f32 %v1047, %v1107
    %v1116 = vadd.f32 %v1048, %v1108
    %v1117 = vadd.f32 %v1049, %v1109
    %v1118 = vadd.f32 %v1050, %v1110
    %v1119 = vadd.f32 %v1051, %v1111
    %1120 = vst [vmem:[#allocation4] sm:$0xff] %v1112
    %1121 = vst [vmem:[#allocation4 + $0x8] sm:$0xff] %v1113
    %1122 = vst [vmem:[#allocation4 + $0x10] sm:$0xff] %v1114
    %1123 = vst [vmem:[#allocation4 + $0x18] sm:$0xff] %v1115
    %1124 = vst [vmem:[#allocation4 + $0x20] sm:$0xff] %v1116
    %1125 = vst [vmem:[#allocation4 + $0x28] sm:$0xff] %v1117
    %1126 = vst [vmem:[#allocation4 + $0x30] sm:$0xff] %v1118
    %1127 = vst [vmem:[#allocation4 + $0x38] sm:$0xff] %v1119
    %v1128 = vld [vmem:[%s2] sm:$0xff]
    %v1129 = vld [vmem:[%s2 + $0x8] sm:$0xff]
    %v1130 = vld [vmem:[%s2 + $0x10] sm:$0xff]
    %v1131 = vld [vmem:[%s2 + $0x18] sm:$0xff]
    %v1132 = vld [vmem:[#allocation2] sm:$0xff]
    %v1133 = vld [vmem:[#allocation3] sm:$0xff]
    %v1134 = vld [vmem:[#allocation4] sm:$0xff]
    %vm1135 = vcmask 261120
    %v1137 = vsel %vm1135, %v1132, 0
    %1139 = vmatprep.subr.mxu0 0.0
    %1140 = vmatpush1.msra.mxu0 %v1128
    %1141 = vmatprep.subr.mxu0 0.0
    %1142 = vmatpush1.msra.mxu0 %v1129
    %1143 = vmatprep.subr.mxu0 0.0
    %1144 = vmatpush1.msra.mxu0 %v1130
    %1145 = vmatprep.subr.mxu0 0.0
    %1146 = vmatpush1.msra.mxu0 %v1131
    %1147 = vmatprep.subr.mxu0 0.0
    %1148 = vmatpush1.msra.mxu0 0.0
    %1149 = vmatprep.subr.mxu0 0.0
    %1150 = vmatpush1.msra.mxu0 0.0
    %1151 = vmatprep.subr.mxu0 0.0
    %1152 = vmatpush1.msra.mxu0 0.0
    %1153 = vmatprep.subr.mxu0 0.0
    %1154 = vmatpush1.msra.mxu0 0.0
    %1155 = vmatprep.subr.mxu0 0.0
    %1156 = vmatpush1.msra.mxu0 0.0
    %1157 = vmatprep.subr.mxu0 0.0
    %1158 = vmatpush1.msra.mxu0 0.0
    %1159 = vmatprep.subr.mxu0 0.0
    %1160 = vmatpush1.msra.mxu0 0.0
    %1161 = vmatprep.subr.mxu0 0.0
    %1162 = vmatpush1.msra.mxu0 0.0
    %1163 = vmatprep.subr.mxu0 0.0
    %1164 = vmatpush1.msra.mxu0 0.0
    %1165 = vmatprep.subr.mxu0 0.0
    %1166 = vmatpush1.msra.mxu0 0.0
    %1167 = vmatprep.subr.mxu0 0.0
    %1168 = vmatpush1.msra.mxu0 0.0
    %1169 = vmatprep.subr.mxu0 0.0
    %1170 = vmatpush1.msra.mxu0 0.0
    %1171 = vmatprep.subr.mxu0 0.0
    %1172 = vmatpush1.msra.mxu0 0.0
    %1173 = vmatprep.subr.mxu0 0.0
    %1174 = vmatpush1.msra.mxu0 0.0
    %1175 = vmatprep.subr.mxu0 0.0
    %1176 = vmatpush1.msra.mxu0 0.0
    %1177 = vmatprep.subr.mxu0 0.0
    %1178 = vmatpush1.msra.mxu0 0.0
    %1179 = vmatprep.subr.mxu0 0.0
    %1180 = vmatpush1.msra.mxu0 0.0
    %1181 = vmatprep.subr.mxu0 0.0
    %1182 = vmatpush1.msra.mxu0 0.0
    %1183 = vmatprep.subr.mxu0 0.0
    %1184 = vmatpush1.msra.mxu0 0.0
    %1185 = vmatprep.subr.mxu0 0.0
    %1186 = vmatpush1.msra.mxu0 0.0
    %1187 = vmatprep.subr.mxu0 0.0
    %1188 = vmatpush1.msra.mxu0 0.0
    %1189 = vmatprep.subr.mxu0 0.0
    %1190 = vmatpush1.msra.mxu0 0.0
    %1191 = vmatprep.subr.mxu0 0.0
    %1192 = vmatpush1.msra.mxu0 0.0
    %1193 = vmatprep.subr.mxu0 0.0
    %1194 = vmatpush1.msra.mxu0 0.0
    %1195 = vmatprep.subr.mxu0 0.0
    %1196 = vmatpush1.msra.mxu0 0.0
    %1197 = vmatprep.subr.mxu0 0.0
    %1198 = vmatpush1.msra.mxu0 0.0
    %1199 = vmatprep.subr.mxu0 0.0
    %1200 = vmatpush1.msra.mxu0 0.0
    %1201 = vmatprep.subr.mxu0 0.0
    %1202 = vmatpush1.msra.mxu0 0.0
    %1203 = vmatprep.mubr.f32.mxu0 0.0
    %1204 = vmatmul.mubr.f32.gmra.mrb[0].mxu0 %v1137
    %v1205 = vpop.f32.mrb[0].mxu0
    %v1206 = vadd.f32 0.0, %v1205
    %v1207 = vpop.f32.mrb[0].mxu0
    %1208 = vdwg.mxu0
    %v1209 = vadd.f32 %v1134, %v1206
    %v1210 = vxor.u32 %v1209, 2147483648
    %v1211 = vmul.f32 %v1210, 1.442695
    %v1212 = vpow.pop %v1211
    %v1213 = vadd.f32 %v1212, 1.0
    %v1214 = vrcp.pop %v1213
    %v1215 = vmul.f32 1.0, %v1214
    %v1216 = vtanh.pop %v1209
    %1218 = vrot.lane.b32.xlu0 %v1133, 32
    %v1219 = vpop.permute.xlu0 %1218
    %v1221 = vmul.f32 %v1215, %v1219
    %1223 = vrot.lane.b32.xlu0 %v1216, 32
    %v1224 = vpop.permute.xlu0 %1223
    %v1226 = vmul.f32 %v1215, %v1224
    %1228 = vrot.lane.b32.xlu0 %v1226, 32
    %v1229 = vpop.permute.xlu0 %1228
    %v1231 = vadd.f32 %v1221, %v1229
    %v1232 = vtanh.pop %v1231
    %1234 = vrot.lane.b32.xlu0 %v1232, 32
    %v1235 = vpop.permute.xlu0 %1234
    %v1237 = vmul.f32 %v1215, %v1235
    %1239 = vrot.lane.b32.xlu0 %v1237, 64
    %v1240 = vpop.permute.xlu0 %1239
    %1242 = vst.msk [vmem:[#allocation5] sm:$0xff] %vm1135, %v1240
    %s1243 = scalar_lea.vmem [#allocation4], 8
    %v1244 = vld [vmem:[%s1243] sm:$0xff]
    %v1245 = vsel %vm1135, %v1240, 0
    %1247 = vmatprep.subr.mxu0 0.0
    %1248 = vmatpush1.msra.mxu0 %v1128
    %1249 = vmatprep.subr.mxu0 0.0
    %1250 = vmatpush1.msra.mxu0 %v1129
    %1251 = vmatprep.subr.mxu0 0.0
    %1252 = vmatpush1.msra.mxu0 %v1130
    %1253 = vmatprep.subr.mxu0 0.0
    %1254 = vmatpush1.msra.mxu0 %v1131
    %1255 = vmatprep.subr.mxu0 0.0
    %1256 = vmatpush1.msra.mxu0 0.0
    %1257 = vmatprep.subr.mxu0 0.0
    %1258 = vmatpush1.msra.mxu0 0.0
    %1259 = vmatprep.subr.mxu0 0.0
    %1260 = vmatpush1.msra.mxu0 0.0
    %1261 = vmatprep.subr.mxu0 0.0
    %1262 = vmatpush1.msra.mxu0 0.0
    %1263 = vmatprep.subr.mxu0 0.0
    %1264 = vmatpush1.msra.mxu0 0.0
    %1265 = vmatprep.subr.mxu0 0.0
    %1266 = vmatpush1.msra.mxu0 0.0
    %1267 = vmatprep.subr.mxu0 0.0
    %1268 = vmatpush1.msra.mxu0 0.0
    %1269 = vmatprep.subr.mxu0 0.0
    %1270 = vmatpush1.msra.mxu0 0.0
    %1271 = vmatprep.subr.mxu0 0.0
    %1272 = vmatpush1.msra.mxu0 0.0
    %1273 = vmatprep.subr.mxu0 0.0
    %1274 = vmatpush1.msra.mxu0 0.0
    %1275 = vmatprep.subr.mxu0 0.0
    %1276 = vmatpush1.msra.mxu0 0.0
    %1277 = vmatprep.subr.mxu0 0.0
    %1278 = vmatpush1.msra.mxu0 0.0
    %1279 = vmatprep.subr.mxu0 0.0
    %1280 = vmatpush1.msra.mxu0 0.0
    %1281 = vmatprep.subr.mxu0 0.0
    %1282 = vmatpush1.msra.mxu0 0.0
    %1283 = vmatprep.subr.mxu0 0.0
    %1284 = vmatpush1.msra.mxu0 0.0
    %1285 = vmatprep.subr.mxu0 0.0
    %1286 = vmatpush1.msra.mxu0 0.0
    %1287 = vmatprep.subr.mxu0 0.0
    %1288 = vmatpush1.msra.mxu0 0.0
    %1289 = vmatprep.subr.mxu0 0.0
    %1290 = vmatpush1.msra.mxu0 0.0
    %1291 = vmatprep.subr.mxu0 0.0
    %1292 = vmatpush1.msra.mxu0 0.0
    %1293 = vmatprep.subr.mxu0 0.0
    %1294 = vmatpush1.msra.mxu0 0.0
    %1295 = vmatprep.subr.mxu0 0.0
    %1296 = vmatpush1.msra.mxu0 0.0
    %1297 = vmatprep.subr.mxu0 0.0
    %1298 = vmatpush1.msra.mxu0 0.0
    %1299 = vmatprep.subr.mxu0 0.0
    %1300 = vmatpush1.msra.mxu0 0.0
    %1301 = vmatprep.subr.mxu0 0.0
    %1302 = vmatpush1.msra.mxu0 0.0
    %1303 = vmatprep.subr.mxu0 0.0
    %1304 = vmatpush1.msra.mxu0 0.0
    %1305 = vmatprep.subr.mxu0 0.0
    %1306 = vmatpush1.msra.mxu0 0.0
    %1307 = vmatprep.subr.mxu0 0.0
    %1308 = vmatpush1.msra.mxu0 0.0
    %1309 = vmatprep.subr.mxu0 0.0
    %1310 = vmatpush1.msra.mxu0 0.0
    %1311 = vmatprep.mubr.f32.mxu0 0.0
    %1312 = vmatmul.mubr.f32.gmra.mrb[0].mxu0 %v1245
    %v1313 = vpop.f32.mrb[0].mxu0
    %v1314 = vadd.f32 0.0, %v1313
    %v1315 = vpop.f32.mrb[0].mxu0
    %1316 = vdwg.mxu0
    %v1317 = vadd.f32 %v1244, %v1314
    %v1318 = vxor.u32 %v1317, 2147483648
    %v1319 = vmul.f32 %v1318, 1.442695
    %v1320 = vpow.pop %v1319
    %v1321 = vadd.f32 %v1320, 1.0
    %v1322 = vrcp.pop %v1321
    %v1323 = vmul.f32 1.0, %v1322
    %v1324 = vtanh.pop %v1317
    %v1325 = vmul.f32 %v1323, %v1231
    %1327 = vrot.lane.b32.xlu0 %v1324, 32
    %v1328 = vpop.permute.xlu0 %1327
    %v1330 = vmul.f32 %v1323, %v1328
    %1332 = vrot.lane.b32.xlu0 %v1330, 32
    %v1333 = vpop.permute.xlu0 %1332
    %v1335 = vadd.f32 %v1325, %v1333
    %v1336 = vtanh.pop %v1335
    %1338 = vrot.lane.b32.xlu0 %v1336, 32
    %v1339 = vpop.permute.xlu0 %1338
    %v1341 = vmul.f32 %v1323, %v1339
    %1343 = vrot.lane.b32.xlu0 %v1341, 64
    %v1344 = vpop.permute.xlu0 %1343
    %s1346 = scalar_lea.vmem [#allocation5], 8
    %1347 = vst.msk [vmem:[%s1346] sm:$0xff] %vm1135, %v1344
    %s1348 = scalar_lea.vmem [#allocation4], 16
    %v1349 = vld [vmem:[%s1348] sm:$0xff]
    %v1350 = vsel %vm1135, %v1344, 0
    %1352 = vmatprep.subr.mxu0 0.0
    %1353 = vmatpush1.msra.mxu0 %v1128
    %1354 = vmatprep.subr.mxu0 0.0
    %1355 = vmatpush1.msra.mxu0 %v1129
    %1356 = vmatprep.subr.mxu0 0.0
    %1357 = vmatpush1.msra.mxu0 %v1130
    %1358 = vmatprep.subr.mxu0 0.0
    %1359 = vmatpush1.msra.mxu0 %v1131
    %1360 = vmatprep.subr.mxu0 0.0
    %1361 = vmatpush1.msra.mxu0 0.0
    %1362 = vmatprep.subr.mxu0 0.0
    %1363 = vmatpush1.msra.mxu0 0.0
    %1364 = vmatprep.subr.mxu0 0.0
    %1365 = vmatpush1.msra.mxu0 0.0
    %1366 = vmatprep.subr.mxu0 0.0
    %1367 = vmatpush1.msra.mxu0 0.0
    %1368 = vmatprep.subr.mxu0 0.0
    %1369 = vmatpush1.msra.mxu0 0.0
    %1370 = vmatprep.subr.mxu0 0.0
    %1371 = vmatpush1.msra.mxu0 0.0
    %1372 = vmatprep.subr.mxu0 0.0
    %1373 = vmatpush1.msra.mxu0 0.0
    %1374 = vmatprep.subr.mxu0 0.0
    %1375 = vmatpush1.msra.mxu0 0.0
    %1376 = vmatprep.subr.mxu0 0.0
    %1377 = vmatpush1.msra.mxu0 0.0
    %1378 = vmatprep.subr.mxu0 0.0
    %1379 = vmatpush1.msra.mxu0 0.0
    %1380 = vmatprep.subr.mxu0 0.0
    %1381 = vmatpush1.msra.mxu0 0.0
    %1382 = vmatprep.subr.mxu0 0.0
    %1383 = vmatpush1.msra.mxu0 0.0
    %1384 = vmatprep.subr.mxu0 0.0
    %1385 = vmatpush1.msra.mxu0 0.0
    %1386 = vmatprep.subr.mxu0 0.0
    %1387 = vmatpush1.msra.mxu0 0.0
    %1388 = vmatprep.subr.mxu0 0.0
    %1389 = vmatpush1.msra.mxu0 0.0
    %1390 = vmatprep.subr.mxu0 0.0
    %1391 = vmatpush1.msra.mxu0 0.0
    %1392 = vmatprep.subr.mxu0 0.0
    %1393 = vmatpush1.msra.mxu0 0.0
    %1394 = vmatprep.subr.mxu0 0.0
    %1395 = vmatpush1.msra.mxu0 0.0
    %1396 = vmatprep.subr.mxu0 0.0
    %1397 = vmatpush1.msra.mxu0 0.0
    %1398 = vmatprep.subr.mxu0 0.0
    %1399 = vmatpush1.msra.mxu0 0.0
    %1400 = vmatprep.subr.mxu0 0.0
    %1401 = vmatpush1.msra.mxu0 0.0
    %1402 = vmatprep.subr.mxu0 0.0
    %1403 = vmatpush1.msra.mxu0 0.0
    %1404 = vmatprep.subr.mxu0 0.0
    %1405 = vmatpush1.msra.mxu0 0.0
    %1406 = vmatprep.subr.mxu0 0.0
    %1407 = vmatpush1.msra.mxu0 0.0
    %1408 = vmatprep.subr.mxu0 0.0
    %1409 = vmatpush1.msra.mxu0 0.0
    %1410 = vmatprep.subr.mxu0 0.0
    %1411 = vmatpush1.msra.mxu0 0.0
    %1412 = vmatprep.subr.mxu0 0.0
    %1413 = vmatpush1.msra.mxu0 0.0
    %1414 = vmatprep.subr.mxu0 0.0
    %1415 = vmatpush1.msra.mxu0 0.0
    %1416 = vmatprep.mubr.f32.mxu0 0.0
    %1417 = vmatmul.mubr.f32.gmra.mrb[0].mxu0 %v1350
    %v1418 = vpop.f32.mrb[0].mxu0
    %v1419 = vadd.f32 0.0, %v1418
    %v1420 = vpop.f32.mrb[0].mxu0
    %1421 = vdwg.mxu0
    %v1422 = vadd.f32 %v1349, %v1419
    %v1423 = vxor.u32 %v1422, 2147483648
    %v1424 = vmul.f32 %v1423, 1.442695
    %v1425 = vpow.pop %v1424
    %v1426 = vadd.f32 %v1425, 1.0
    %v1427 = vrcp.pop %v1426
    %v1428 = vmul.f32 1.0, %v1427
    %v1429 = vtanh.pop %v1422
    %v1430 = vmul.f32 %v1428, %v1335
    %1432 = vrot.lane.b32.xlu0 %v1429, 32
    %v1433 = vpop.permute.xlu0 %1432
    %v1435 = vmul.f32 %v1428, %v1433
    %1437 = vrot.lane.b32.xlu0 %v1435, 32
    %v1438 = vpop.permute.xlu0 %1437
    %v1440 = vadd.f32 %v1430, %v1438
    %v1441 = vtanh.pop %v1440
    %1443 = vrot.lane.b32.xlu0 %v1441, 32
    %v1444 = vpop.permute.xlu0 %1443
    %v1446 = vmul.f32 %v1428, %v1444
    %1448 = vrot.lane.b32.xlu0 %v1446, 64
    %v1449 = vpop.permute.xlu0 %1448
    %s1451 = scalar_lea.vmem [#allocation5], 16
    %1452 = vst.msk [vmem:[%s1451] sm:$0xff] %vm1135, %v1449
    %s1453 = scalar_lea.vmem [#allocation4], 24
    %v1454 = vld [vmem:[%s1453] sm:$0xff]
    %v1455 = vsel %vm1135, %v1449, 0
    %1457 = vmatprep.subr.mxu0 0.0
    %1458 = vmatpush1.msra.mxu0 %v1128
    %1459 = vmatprep.subr.mxu0 0.0
    %1460 = vmatpush1.msra.mxu0 %v1129
    %1461 = vmatprep.subr.mxu0 0.0
    %1462 = vmatpush1.msra.mxu0 %v1130
    %1463 = vmatprep.subr.mxu0 0.0
    %1464 = vmatpush1.msra.mxu0 %v1131
    %1465 = vmatprep.subr.mxu0 0.0
    %1466 = vmatpush1.msra.mxu0 0.0
    %1467 = vmatprep.subr.mxu0 0.0
    %1468 = vmatpush1.msra.mxu0 0.0
    %1469 = vmatprep.subr.mxu0 0.0
    %1470 = vmatpush1.msra.mxu0 0.0
    %1471 = vmatprep.subr.mxu0 0.0
    %1472 = vmatpush1.msra.mxu0 0.0
    %1473 = vmatprep.subr.mxu0 0.0
    %1474 = vmatpush1.msra.mxu0 0.0
    %1475 = vmatprep.subr.mxu0 0.0
    %1476 = vmatpush1.msra.mxu0 0.0
    %1477 = vmatprep.subr.mxu0 0.0
    %1478 = vmatpush1.msra.mxu0 0.0
    %1479 = vmatprep.subr.mxu0 0.0
    %1480 = vmatpush1.msra.mxu0 0.0
    %1481 = vmatprep.subr.mxu0 0.0
    %1482 = vmatpush1.msra.mxu0 0.0
    %1483 = vmatprep.subr.mxu0 0.0
    %1484 = vmatpush1.msra.mxu0 0.0
    %1485 = vmatprep.subr.mxu0 0.0
    %1486 = vmatpush1.msra.mxu0 0.0
    %1487 = vmatprep.subr.mxu0 0.0
    %1488 = vmatpush1.msra.mxu0 0.0
    %1489 = vmatprep.subr.mxu0 0.0
    %1490 = vmatpush1.msra.mxu0 0.0
    %1491 = vmatprep.subr.mxu0 0.0
    %1492 = vmatpush1.msra.mxu0 0.0
    %1493 = vmatprep.subr.mxu0 0.0
    %1494 = vmatpush1.msra.mxu0 0.0
    %1495 = vmatprep.subr.mxu0 0.0
    %1496 = vmatpush1.msra.mxu0 0.0
    %1497 = vmatprep.subr.mxu0 0.0
    %1498 = vmatpush1.msra.mxu0 0.0
    %1499 = vmatprep.subr.mxu0 0.0
    %1500 = vmatpush1.msra.mxu0 0.0
    %1501 = vmatprep.subr.mxu0 0.0
    %1502 = vmatpush1.msra.mxu0 0.0
    %1503 = vmatprep.subr.mxu0 0.0
    %1504 = vmatpush1.msra.mxu0 0.0
    %1505 = vmatprep.subr.mxu0 0.0
    %1506 = vmatpush1.msra.mxu0 0.0
    %1507 = vmatprep.subr.mxu0 0.0
    %1508 = vmatpush1.msra.mxu0 0.0
    %1509 = vmatprep.subr.mxu0 0.0
    %1510 = vmatpush1.msra.mxu0 0.0
    %1511 = vmatprep.subr.mxu0 0.0
    %1512 = vmatpush1.msra.mxu0 0.0
    %1513 = vmatprep.subr.mxu0 0.0
    %1514 = vmatpush1.msra.mxu0 0.0
    %1515 = vmatprep.subr.mxu0 0.0
    %1516 = vmatpush1.msra.mxu0 0.0
    %1517 = vmatprep.subr.mxu0 0.0
    %1518 = vmatpush1.msra.mxu0 0.0
    %1519 = vmatprep.subr.mxu0 0.0
    %1520 = vmatpush1.msra.mxu0 0.0
    %1521 = vmatprep.mubr.f32.mxu0 0.0
    %1522 = vmatmul.mubr.f32.gmra.mrb[0].mxu0 %v1455
    %v1523 = vpop.f32.mrb[0].mxu0
    %v1524 = vadd.f32 0.0, %v1523
    %v1525 = vpop.f32.mrb[0].mxu0
    %1526 = vdwg.mxu0
    %v1527 = vadd.f32 %v1454, %v1524
    %v1528 = vxor.u32 %v1527, 2147483648
    %v1529 = vmul.f32 %v1528, 1.442695
    %v1530 = vpow.pop %v1529
    %v1531 = vadd.f32 %v1530, 1.0
    %v1532 = vrcp.pop %v1531
    %v1533 = vmul.f32 1.0, %v1532
    %v1534 = vtanh.pop %v1527
    %v1535 = vmul.f32 %v1533, %v1440
    %1537 = vrot.lane.b32.xlu0 %v1534, 32
    %v1538 = vpop.permute.xlu0 %1537
    %v1540 = vmul.f32 %v1533, %v1538
    %1542 = vrot.lane.b32.xlu0 %v1540, 32
    %v1543 = vpop.permute.xlu0 %1542
    %v1545 = vadd.f32 %v1535, %v1543
    %v1546 = vtanh.pop %v1545
    %1548 = vrot.lane.b32.xlu0 %v1546, 32
    %v1549 = vpop.permute.xlu0 %1548
    %v1551 = vmul.f32 %v1533, %v1549
    %1553 = vrot.lane.b32.xlu0 %v1551, 64
    %v1554 = vpop.permute.xlu0 %1553
    %s1556 = scalar_lea.vmem [#allocation5], 24
    %1557 = vst.msk [vmem:[%s1556] sm:$0xff] %vm1135, %v1554
    %s1558 = scalar_lea.vmem [#allocation4], 32
    %v1559 = vld [vmem:[%s1558] sm:$0xff]
    %v1560 = vsel %vm1135, %v1554, 0
    %1562 = vmatprep.subr.mxu0 0.0
    %1563 = vmatpush1.msra.mxu0 %v1128
    %1564 = vmatprep.subr.mxu0 0.0
    %1565 = vmatpush1.msra.mxu0 %v1129
    %1566 = vmatprep.subr.mxu0 0.0
    %1567 = vmatpush1.msra.mxu0 %v1130
    %1568 = vmatprep.subr.mxu0 0.0
    %1569 = vmatpush1.msra.mxu0 %v1131
    %1570 = vmatprep.subr.mxu0 0.0
    %1571 = vmatpush1.msra.mxu0 0.0
    %1572 = vmatprep.subr.mxu0 0.0
    %1573 = vmatpush1.msra.mxu0 0.0
    %1574 = vmatprep.subr.mxu0 0.0
    %1575 = vmatpush1.msra.mxu0 0.0
    %1576 = vmatprep.subr.mxu0 0.0
    %1577 = vmatpush1.msra.mxu0 0.0
    %1578 = vmatprep.subr.mxu0 0.0
    %1579 = vmatpush1.msra.mxu0 0.0
    %1580 = vmatprep.subr.mxu0 0.0
    %1581 = vmatpush1.msra.mxu0 0.0
    %1582 = vmatprep.subr.mxu0 0.0
    %1583 = vmatpush1.msra.mxu0 0.0
    %1584 = vmatprep.subr.mxu0 0.0
    %1585 = vmatpush1.msra.mxu0 0.0
    %1586 = vmatprep.subr.mxu0 0.0
    %1587 = vmatpush1.msra.mxu0 0.0
    %1588 = vmatprep.subr.mxu0 0.0
    %1589 = vmatpush1.msra.mxu0 0.0
    %1590 = vmatprep.subr.mxu0 0.0
    %1591 = vmatpush1.msra.mxu0 0.0
    %1592 = vmatprep.subr.mxu0 0.0
    %1593 = vmatpush1.msra.mxu0 0.0
    %1594 = vmatprep.subr.mxu0 0.0
    %1595 = vmatpush1.msra.mxu0 0.0
    %1596 = vmatprep.subr.mxu0 0.0
    %1597 = vmatpush1.msra.mxu0 0.0
    %1598 = vmatprep.subr.mxu0 0.0
    %1599 = vmatpush1.msra.mxu0 0.0
    %1600 = vmatprep.subr.mxu0 0.0
    %1601 = vmatpush1.msra.mxu0 0.0
    %1602 = vmatprep.subr.mxu0 0.0
    %1603 = vmatpush1.msra.mxu0 0.0
    %1604 = vmatprep.subr.mxu0 0.0
    %1605 = vmatpush1.msra.mxu0 0.0
    %1606 = vmatprep.subr.mxu0 0.0
    %1607 = vmatpush1.msra.mxu0 0.0
    %1608 = vmatprep.subr.mxu0 0.0
    %1609 = vmatpush1.msra.mxu0 0.0
    %1610 = vmatprep.subr.mxu0 0.0
    %1611 = vmatpush1.msra.mxu0 0.0
    %1612 = vmatprep.subr.mxu0 0.0
    %1613 = vmatpush1.msra.mxu0 0.0
    %1614 = vmatprep.subr.mxu0 0.0
    %1615 = vmatpush1.msra.mxu0 0.0
    %1616 = vmatprep.subr.mxu0 0.0
    %1617 = vmatpush1.msra.mxu0 0.0
    %1618 = vmatprep.subr.mxu0 0.0
    %1619 = vmatpush1.msra.mxu0 0.0
    %1620 = vmatprep.subr.mxu0 0.0
    %1621 = vmatpush1.msra.mxu0 0.0
    %1622 = vmatprep.subr.mxu0 0.0
    %1623 = vmatpush1.msra.mxu0 0.0
    %1624 = vmatprep.subr.mxu0 0.0
    %1625 = vmatpush1.msra.mxu0 0.0
    %1626 = vmatprep.mubr.f32.mxu0 0.0
    %1627 = vmatmul.mubr.f32.gmra.mrb[0].mxu0 %v1560
    %v1628 = vpop.f32.mrb[0].mxu0
    %v1629 = vadd.f32 0.0, %v1628
    %v1630 = vpop.f32.mrb[0].mxu0
    %1631 = vdwg.mxu0
    %v1632 = vadd.f32 %v1559, %v1629
    %v1633 = vxor.u32 %v1632, 2147483648
    %v1634 = vmul.f32 %v1633, 1.442695
    %v1635 = vpow.pop %v1634
    %v1636 = vadd.f32 %v1635, 1.0
    %v1637 = vrcp.pop %v1636
    %v1638 = vmul.f32 1.0, %v1637
    %v1639 = vtanh.pop %v1632
    %v1640 = vmul.f32 %v1638, %v1545
    %1642 = vrot.lane.b32.xlu0 %v1639, 32
    %v1643 = vpop.permute.xlu0 %1642
    %v1645 = vmul.f32 %v1638, %v1643
    %1647 = vrot.lane.b32.xlu0 %v1645, 32
    %v1648 = vpop.permute.xlu0 %1647
    %v1650 = vadd.f32 %v1640, %v1648
    %v1651 = vtanh.pop %v1650
    %1653 = vrot.lane.b32.xlu0 %v1651, 32
    %v1654 = vpop.permute.xlu0 %1653
    %v1656 = vmul.f32 %v1638, %v1654
    %1658 = vrot.lane.b32.xlu0 %v1656, 64
    %v1659 = vpop.permute.xlu0 %1658
    %s1661 = scalar_lea.vmem [#allocation5], 32
    %1662 = vst.msk [vmem:[%s1661] sm:$0xff] %vm1135, %v1659
    %s1663 = scalar_lea.vmem [#allocation4], 40
    %v1664 = vld [vmem:[%s1663] sm:$0xff]
    %v1665 = vsel %vm1135, %v1659, 0
    %1667 = vmatprep.subr.mxu0 0.0
    %1668 = vmatpush1.msra.mxu0 %v1128
    %1669 = vmatprep.subr.mxu0 0.0
    %1670 = vmatpush1.msra.mxu0 %v1129
    %1671 = vmatprep.subr.mxu0 0.0
    %1672 = vmatpush1.msra.mxu0 %v1130
    %1673 = vmatprep.subr.mxu0 0.0
    %1674 = vmatpush1.msra.mxu0 %v1131
    %1675 = vmatprep.subr.mxu0 0.0
    %1676 = vmatpush1.msra.mxu0 0.0
    %1677 = vmatprep.subr.mxu0 0.0
    %1678 = vmatpush1.msra.mxu0 0.0
    %1679 = vmatprep.subr.mxu0 0.0
    %1680 = vmatpush1.msra.mxu0 0.0
    %1681 = vmatprep.subr.mxu0 0.0
    %1682 = vmatpush1.msra.mxu0 0.0
    %1683 = vmatprep.subr.mxu0 0.0
    %1684 = vmatpush1.msra.mxu0 0.0
    %1685 = vmatprep.subr.mxu0 0.0
    %1686 = vmatpush1.msra.mxu0 0.0
    %1687 = vmatprep.subr.mxu0 0.0
    %1688 = vmatpush1.msra.mxu0 0.0
    %1689 = vmatprep.subr.mxu0 0.0
    %1690 = vmatpush1.msra.mxu0 0.0
    %1691 = vmatprep.subr.mxu0 0.0
    %1692 = vmatpush1.msra.mxu0 0.0
    %1693 = vmatprep.subr.mxu0 0.0
    %1694 = vmatpush1.msra.mxu0 0.0
    %1695 = vmatprep.subr.mxu0 0.0
    %1696 = vmatpush1.msra.mxu0 0.0
    %1697 = vmatprep.subr.mxu0 0.0
    %1698 = vmatpush1.msra.mxu0 0.0
    %1699 = vmatprep.subr.mxu0 0.0
    %1700 = vmatpush1.msra.mxu0 0.0
    %1701 = vmatprep.subr.mxu0 0.0
    %1702 = vmatpush1.msra.mxu0 0.0
    %1703 = vmatprep.subr.mxu0 0.0
    %1704 = vmatpush1.msra.mxu0 0.0
    %1705 = vmatprep.subr.mxu0 0.0
    %1706 = vmatpush1.msra.mxu0 0.0
    %1707 = vmatprep.subr.mxu0 0.0
    %1708 = vmatpush1.msra.mxu0 0.0
    %1709 = vmatprep.subr.mxu0 0.0
    %1710 = vmatpush1.msra.mxu0 0.0
    %1711 = vmatprep.subr.mxu0 0.0
    %1712 = vmatpush1.msra.mxu0 0.0
    %1713 = vmatprep.subr.mxu0 0.0
    %1714 = vmatpush1.msra.mxu0 0.0
    %1715 = vmatprep.subr.mxu0 0.0
    %1716 = vmatpush1.msra.mxu0 0.0
    %1717 = vmatprep.subr.mxu0 0.0
    %1718 = vmatpush1.msra.mxu0 0.0
    %1719 = vmatprep.subr.mxu0 0.0
    %1720 = vmatpush1.msra.mxu0 0.0
    %1721 = vmatprep.subr.mxu0 0.0
    %1722 = vmatpush1.msra.mxu0 0.0
    %1723 = vmatprep.subr.mxu0 0.0
    %1724 = vmatpush1.msra.mxu0 0.0
    %1725 = vmatprep.subr.mxu0 0.0
    %1726 = vmatpush1.msra.mxu0 0.0
    %1727 = vmatprep.subr.mxu0 0.0
    %1728 = vmatpush1.msra.mxu0 0.0
    %1729 = vmatprep.subr.mxu0 0.0
    %1730 = vmatpush1.msra.mxu0 0.0
    %1731 = vmatprep.mubr.f32.mxu0 0.0
    %1732 = vmatmul.mubr.f32.gmra.mrb[0].mxu0 %v1665
    %v1733 = vpop.f32.mrb[0].mxu0
    %v1734 = vadd.f32 0.0, %v1733
    %v1735 = vpop.f32.mrb[0].mxu0
    %1736 = vdwg.mxu0
    %v1737 = vadd.f32 %v1664, %v1734
    %v1738 = vxor.u32 %v1737, 2147483648
    %v1739 = vmul.f32 %v1738, 1.442695
    %v1740 = vpow.pop %v1739
    %v1741 = vadd.f32 %v1740, 1.0
    %v1742 = vrcp.pop %v1741
    %v1743 = vmul.f32 1.0, %v1742
    %v1744 = vtanh.pop %v1737
    %v1745 = vmul.f32 %v1743, %v1650
    %1747 = vrot.lane.b32.xlu0 %v1744, 32
    %v1748 = vpop.permute.xlu0 %1747
    %v1750 = vmul.f32 %v1743, %v1748
    %1752 = vrot.lane.b32.xlu0 %v1750, 32
    %v1753 = vpop.permute.xlu0 %1752
    %v1755 = vadd.f32 %v1745, %v1753
    %v1756 = vtanh.pop %v1755
    %1758 = vrot.lane.b32.xlu0 %v1756, 32
    %v1759 = vpop.permute.xlu0 %1758
    %v1761 = vmul.f32 %v1743, %v1759
    %1763 = vrot.lane.b32.xlu0 %v1761, 64
    %v1764 = vpop.permute.xlu0 %1763
    %s1766 = scalar_lea.vmem [#allocation5], 40
    %1767 = vst.msk [vmem:[%s1766] sm:$0xff] %vm1135, %v1764
    %s1768 = scalar_lea.vmem [#allocation4], 48
    %v1769 = vld [vmem:[%s1768] sm:$0xff]
    %v1770 = vsel %vm1135, %v1764, 0
    %1772 = vmatprep.subr.mxu0 0.0
    %1773 = vmatpush1.msra.mxu0 %v1128
    %1774 = vmatprep.subr.mxu0 0.0
    %1775 = vmatpush1.msra.mxu0 %v1129
    %1776 = vmatprep.subr.mxu0 0.0
    %1777 = vmatpush1.msra.mxu0 %v1130
    %1778 = vmatprep.subr.mxu0 0.0
    %1779 = vmatpush1.msra.mxu0 %v1131
    %1780 = vmatprep.subr.mxu0 0.0
    %1781 = vmatpush1.msra.mxu0 0.0
    %1782 = vmatprep.subr.mxu0 0.0
    %1783 = vmatpush1.msra.mxu0 0.0
    %1784 = vmatprep.subr.mxu0 0.0
    %1785 = vmatpush1.msra.mxu0 0.0
    %1786 = vmatprep.subr.mxu0 0.0
    %1787 = vmatpush1.msra.mxu0 0.0
    %1788 = vmatprep.subr.mxu0 0.0
    %1789 = vmatpush1.msra.mxu0 0.0
    %1790 = vmatprep.subr.mxu0 0.0
    %1791 = vmatpush1.msra.mxu0 0.0
    %1792 = vmatprep.subr.mxu0 0.0
    %1793 = vmatpush1.msra.mxu0 0.0
    %1794 = vmatprep.subr.mxu0 0.0
    %1795 = vmatpush1.msra.mxu0 0.0
    %1796 = vmatprep.subr.mxu0 0.0
    %1797 = vmatpush1.msra.mxu0 0.0
    %1798 = vmatprep.subr.mxu0 0.0
    %1799 = vmatpush1.msra.mxu0 0.0
    %1800 = vmatprep.subr.mxu0 0.0
    %1801 = vmatpush1.msra.mxu0 0.0
    %1802 = vmatprep.subr.mxu0 0.0
    %1803 = vmatpush1.msra.mxu0 0.0
    %1804 = vmatprep.subr.mxu0 0.0
    %1805 = vmatpush1.msra.mxu0 0.0
    %1806 = vmatprep.subr.mxu0 0.0
    %1807 = vmatpush1.msra.mxu0 0.0
    %1808 = vmatprep.subr.mxu0 0.0
    %1809 = vmatpush1.msra.mxu0 0.0
    %1810 = vmatprep.subr.mxu0 0.0
    %1811 = vmatpush1.msra.mxu0 0.0
    %1812 = vmatprep.subr.mxu0 0.0
    %1813 = vmatpush1.msra.mxu0 0.0
    %1814 = vmatprep.subr.mxu0 0.0
    %1815 = vmatpush1.msra.mxu0 0.0
    %1816 = vmatprep.subr.mxu0 0.0
    %1817 = vmatpush1.msra.mxu0 0.0
    %1818 = vmatprep.subr.mxu0 0.0
    %1819 = vmatpush1.msra.mxu0 0.0
    %1820 = vmatprep.subr.mxu0 0.0
    %1821 = vmatpush1.msra.mxu0 0.0
    %1822 = vmatprep.subr.mxu0 0.0
    %1823 = vmatpush1.msra.mxu0 0.0
    %1824 = vmatprep.subr.mxu0 0.0
    %1825 = vmatpush1.msra.mxu0 0.0
    %1826 = vmatprep.subr.mxu0 0.0
    %1827 = vmatpush1.msra.mxu0 0.0
    %1828 = vmatprep.subr.mxu0 0.0
    %1829 = vmatpush1.msra.mxu0 0.0
    %1830 = vmatprep.subr.mxu0 0.0
    %1831 = vmatpush1.msra.mxu0 0.0
    %1832 = vmatprep.subr.mxu0 0.0
    %1833 = vmatpush1.msra.mxu0 0.0
    %1834 = vmatprep.subr.mxu0 0.0
    %1835 = vmatpush1.msra.mxu0 0.0
    %1836 = vmatprep.mubr.f32.mxu0 0.0
    %1837 = vmatmul.mubr.f32.gmra.mrb[0].mxu0 %v1770
    %v1838 = vpop.f32.mrb[0].mxu0
    %v1839 = vadd.f32 0.0, %v1838
    %v1840 = vpop.f32.mrb[0].mxu0
    %1841 = vdwg.mxu0
    %v1842 = vadd.f32 %v1769, %v1839
    %v1843 = vxor.u32 %v1842, 2147483648
    %v1844 = vmul.f32 %v1843, 1.442695
    %v1845 = vpow.pop %v1844
    %v1846 = vadd.f32 %v1845, 1.0
    %v1847 = vrcp.pop %v1846
    %v1848 = vmul.f32 1.0, %v1847
    %v1849 = vtanh.pop %v1842
    %v1850 = vmul.f32 %v1848, %v1755
    %1852 = vrot.lane.b32.xlu0 %v1849, 32
    %v1853 = vpop.permute.xlu0 %1852
    %v1855 = vmul.f32 %v1848, %v1853
    %1857 = vrot.lane.b32.xlu0 %v1855, 32
    %v1858 = vpop.permute.xlu0 %1857
    %v1860 = vadd.f32 %v1850, %v1858
    %v1861 = vtanh.pop %v1860
    %1863 = vrot.lane.b32.xlu0 %v1861, 32
    %v1864 = vpop.permute.xlu0 %1863
    %v1866 = vmul.f32 %v1848, %v1864
    %1868 = vrot.lane.b32.xlu0 %v1866, 64
    %v1869 = vpop.permute.xlu0 %1868
    %s1871 = scalar_lea.vmem [#allocation5], 48
    %1872 = vst.msk [vmem:[%s1871] sm:$0xff] %vm1135, %v1869
    %s1873 = scalar_lea.vmem [#allocation4], 56
    %v1874 = vld [vmem:[%s1873] sm:$0xff]
    %v1875 = vsel %vm1135, %v1869, 0
    %1877 = vmatprep.subr.mxu0 0.0
    %1878 = vmatpush1.msra.mxu0 %v1128
    %1879 = vmatprep.subr.mxu0 0.0
    %1880 = vmatpush1.msra.mxu0 %v1129
    %1881 = vmatprep.subr.mxu0 0.0
    %1882 = vmatpush1.msra.mxu0 %v1130
    %1883 = vmatprep.subr.mxu0 0.0
    %1884 = vmatpush1.msra.mxu0 %v1131
    %1885 = vmatprep.subr.mxu0 0.0
    %1886 = vmatpush1.msra.mxu0 0.0
    %1887 = vmatprep.subr.mxu0 0.0
    %1888 = vmatpush1.msra.mxu0 0.0
    %1889 = vmatprep.subr.mxu0 0.0
    %1890 = vmatpush1.msra.mxu0 0.0
    %1891 = vmatprep.subr.mxu0 0.0
    %1892 = vmatpush1.msra.mxu0 0.0
    %1893 = vmatprep.subr.mxu0 0.0
    %1894 = vmatpush1.msra.mxu0 0.0
    %1895 = vmatprep.subr.mxu0 0.0
    %1896 = vmatpush1.msra.mxu0 0.0
    %1897 = vmatprep.subr.mxu0 0.0
    %1898 = vmatpush1.msra.mxu0 0.0
    %1899 = vmatprep.subr.mxu0 0.0
    %1900 = vmatpush1.msra.mxu0 0.0
    %1901 = vmatprep.subr.mxu0 0.0
    %1902 = vmatpush1.msra.mxu0 0.0
    %1903 = vmatprep.subr.mxu0 0.0
    %1904 = vmatpush1.msra.mxu0 0.0
    %1905 = vmatprep.subr.mxu0 0.0
    %1906 = vmatpush1.msra.mxu0 0.0
    %1907 = vmatprep.subr.mxu0 0.0
    %1908 = vmatpush1.msra.mxu0 0.0
    %1909 = vmatprep.subr.mxu0 0.0
    %1910 = vmatpush1.msra.mxu0 0.0
    %1911 = vmatprep.subr.mxu0 0.0
    %1912 = vmatpush1.msra.mxu0 0.0
    %1913 = vmatprep.subr.mxu0 0.0
    %1914 = vmatpush1.msra.mxu0 0.0
    %1915 = vmatprep.subr.mxu0 0.0
    %1916 = vmatpush1.msra.mxu0 0.0
    %1917 = vmatprep.subr.mxu0 0.0
    %1918 = vmatpush1.msra.mxu0 0.0
    %1919 = vmatprep.subr.mxu0 0.0
    %1920 = vmatpush1.msra.mxu0 0.0
    %1921 = vmatprep.subr.mxu0 0.0
    %1922 = vmatpush1.msra.mxu0 0.0
    %1923 = vmatprep.subr.mxu0 0.0
    %1924 = vmatpush1.msra.mxu0 0.0
    %1925 = vmatprep.subr.mxu0 0.0
    %1926 = vmatpush1.msra.mxu0 0.0
    %1927 = vmatprep.subr.mxu0 0.0
    %1928 = vmatpush1.msra.mxu0 0.0
    %1929 = vmatprep.subr.mxu0 0.0
    %1930 = vmatpush1.msra.mxu0 0.0
    %1931 = vmatprep.subr.mxu0 0.0
    %1932 = vmatpush1.msra.mxu0 0.0
    %1933 = vmatprep.subr.mxu0 0.0
    %1934 = vmatpush1.msra.mxu0 0.0
    %1935 = vmatprep.subr.mxu0 0.0
    %1936 = vmatpush1.msra.mxu0 0.0
    %1937 = vmatprep.subr.mxu0 0.0
    %1938 = vmatpush1.msra.mxu0 0.0
    %1939 = vmatprep.subr.mxu0 0.0
    %1940 = vmatpush1.msra.mxu0 0.0
    %1941 = vmatprep.mubr.f32.mxu0 0.0
    %1942 = vmatmul.mubr.f32.gmra.mrb[0].mxu0 %v1875
    %v1943 = vpop.f32.mrb[0].mxu0
    %v1944 = vadd.f32 0.0, %v1943
    %v1945 = vpop.f32.mrb[0].mxu0
    %1946 = vdwg.mxu0
    %v1947 = vadd.f32 %v1874, %v1944
    %v1948 = vxor.u32 %v1947, 2147483648
    %v1949 = vmul.f32 %v1948, 1.442695
    %v1950 = vpow.pop %v1949
    %v1951 = vadd.f32 %v1950, 1.0
    %v1952 = vrcp.pop %v1951
    %v1953 = vmul.f32 1.0, %v1952
    %v1954 = vtanh.pop %v1947
    %v1955 = vmul.f32 %v1953, %v1860
    %1957 = vrot.lane.b32.xlu0 %v1954, 32
    %v1958 = vpop.permute.xlu0 %1957
    %v1960 = vmul.f32 %v1953, %v1958
    %1962 = vrot.lane.b32.xlu0 %v1960, 32
    %v1963 = vpop.permute.xlu0 %1962
    %v1965 = vadd.f32 %v1955, %v1963
    %v1966 = vtanh.pop %v1965
    %1968 = vrot.lane.b32.xlu0 %v1966, 32
    %v1969 = vpop.permute.xlu0 %1968
    %v1971 = vmul.f32 %v1953, %v1969
    %1973 = vrot.lane.b32.xlu0 %v1971, 64
    %v1974 = vpop.permute.xlu0 %1973
    %s1976 = scalar_lea.vmem [#allocation5], 56
    %1977 = vst.msk [vmem:[%s1976] sm:$0xff] %vm1135, %v1974
    %1978 = vst.msk [vmem:[#allocation2] sm:$0xff] %vm1135, %v1974
    %1980 = vrot.lane.b32.xlu0 %v1965, 96
    %v1981 = vpop.permute.xlu0 %1980
    %1983 = vst.msk [vmem:[#allocation3] sm:$0xff] %vm1135, %v1981
    %v1984 = vld [vmem:[#allocation5] ss:$4 sm:$0xff]
    %s1985 = scalar_lea.vmem [#allocation5], 32
    %v1986 = vld [vmem:[%s1985] ss:$4 sm:$0xff]
    %s1987 = scalar_lea.vmem [#allocation5], 1
    %v1988 = vld [vmem:[%s1987] ss:$4 sm:$0xff]
    %s1989 = scalar_lea.vmem [#allocation5], 33
    %v1990 = vld [vmem:[%s1989] ss:$4 sm:$0xff]
    %s1991 = scalar_lea.vmem [#allocation5], 2
    %v1992 = vld [vmem:[%s1991] ss:$4 sm:$0xff]
    %s1993 = scalar_lea.vmem [#allocation5], 34
    %v1994 = vld [vmem:[%s1993] ss:$4 sm:$0xff]
    %s1995 = scalar_lea.vmem [#allocation5], 3
    %v1996 = vld [vmem:[%s1995] ss:$4 sm:$0xff]
    %s1997 = scalar_lea.vmem [#allocation5], 35
    %v1998 = vld [vmem:[%s1997] ss:$4 sm:$0xff]
    %2001 = vrot.lane.b32.xlu0 %v1988, 32
    %v2002 = vpop.permute.xlu0 %2001
    %2003 = vrot.lane.b32.xlu0 %v1990, 32
    %v2004 = vpop.permute.xlu0 %2003
    %2009 = vrot.lane.b32.xlu0 %v1992, 64
    %v2010 = vpop.permute.xlu0 %2009
    %2011 = vrot.lane.b32.xlu0 %v1994, 64
    %v2012 = vpop.permute.xlu0 %2011
    %2017 = vrot.lane.b32.xlu0 %v1996, 96
    %v2018 = vpop.permute.xlu0 %2017
    %2019 = vrot.lane.b32.xlu0 %v1998, 96
    %v2020 = vpop.permute.xlu0 %2019
    %v2023 = vsel %vm1135, %v1984, %v2002
    %v2024 = vsel %vm1135, %v1986, %v2004
    %vm2025 = vcmask 523264
    %v2026 = vsel %vm2025, %v2023, %v2010
    %v2027 = vsel %vm2025, %v2024, %v2012
    %vm2028 = vcmask 785408
    %v2029 = vsel %vm2028, %v2026, %v2018
    %v2030 = vsel %vm2028, %v2027, %v2020
    %2031 = vst [vmem:[#allocation6] sm:$0xff] %v2029
    %2032 = vst [vmem:[#allocation6 + $0x8] sm:$0xff] %v2030
    // Predicated region
    $region18: #{tpu_custom_call.1} parent=1 // pred_check
      _
    $region19: #{tpu_custom_call.1} parent=1 // pred_check_branch
      %2034 = sbr.rel (0) target = $region21
    $region20: #{tpu_custom_call.1} parent=1 // pred_region
      %s2036 = ssub.s32 256, 256
      %2037 = vsyncadd [#allocation7], %s2036
      %s2038 = sshll.u32 [#allocation6], 4
      %s2039 = int_to_ptr.vmem [resolvable:$true] %s2038
      %2044 = dma.vmem_to_hbm [thread:$0]  %s2039, 256, %s3, [#allocation7], 128, 128, 8
    $region21: #{tpu_custom_call.1} parent=1 // pred_fallthru
      _
    // Predicated region
    $region22: #{tpu_custom_call.1} parent=1 // pred_check
      _
    $region23: #{tpu_custom_call.1} parent=1 // pred_check_branch
      %2046 = sbr.rel (0) target = $region25
    $region24: #{tpu_custom_call.1} parent=1 // pred_region
      %2047 = dma.done [#allocation7], 256
    $region25: #{tpu_custom_call.1} parent=1 // pred_fallthru
      _
    %2048 = vsyncpa [#allocation7], 1

</llo_original>
